<compile_context>
chip_gen: v7x
topology: tpu7x:2x2x1
jax: 0.10.0
libtpu: 0.0.40
codegen_flags: <defaults>
</compile_context>

<pallas_src>
import jax
import jax.numpy as jnp
from jax import lax
from jax.experimental import pallas as pl
from jax.experimental.pallas import tpu as pltpu

NOUT = 128  # lane-dense padded width of the fused classifier|regressor output


# -----------------------------------------------------------------------------
# Pallas kernel: one grid step = one batch sample (parallel across TensorCores).
# -----------------------------------------------------------------------------
def _head_kernel(x_ref, dwt_ref, bn_ref, sew_ref, seb_ref, wp_ref, pwsb_ref,
                 wh_ref, bh_ref, out_ref, xpad_ref):
    _, H, W, C = x_ref.shape
    Hp, Wp, C4 = xpad_ref.shape
    Cr = sew_ref.shape[1]
    C2 = 2 * C
    HW = H * W

    # ---- zero only the 2-wide padding border; interior is overwritten below.
    #      (done every step so it is megacore-safe under the "parallel" split)
    xpad_ref[0:2, :, :] = jnp.zeros((2, Wp, C4), jnp.float32)
    xpad_ref[2 + H:, :, :] = jnp.zeros((Hp - H - 2, Wp, C4), jnp.float32)
    xpad_ref[2:2 + H, 0:2, :] = jnp.zeros((H, 2, C4), jnp.float32)
    xpad_ref[2:2 + H, 2 + W:, :] = jnp.zeros((H, Wp - W - 2, C4), jnp.float32)

    # ---- replicate the (H, W, C) input 4x along the lane axis, once ----------
    xv = x_ref[0]                                            # (H, W, C)
    xpad_ref[2:2 + H, 2:2 + W, :] = jnp.concatenate([xv, xv, xv, xv], axis=-1)

    # ---- fused 3x3 + 5x5 depthwise conv: ONE packed (H, W, 4C) accumulator ---
    # dwt row t = [w3a | w3b | w5a | w5b] for 5x5 tap t (w3 entries are zero on
    # the 16 outer taps).  Weights hoisted into one packed value; each tap slab
    # is streamed straight from the padded ref (never held as a big live value).
    dwt = dwt_ref[...]                                       # (25, 4C)
    acc = jnp.zeros((H, W, C4), jnp.float32)
    for dh in range(5):
        for dw in range(5):
            tap = xpad_ref[dh:dh + H, dw:dw + W, :]          # (H, W, 4C)
            acc = acc + tap * dwt[dh * 5 + dw]

    # ---- folded BatchNorm + ReLU on all four streams at once -----------------
    feat = jnp.maximum(acc * bn_ref[0] + bn_ref[1], 0.0)
    feat2 = feat.reshape(HW, C4)                             # [f1a|f1b|f2a|f2b]

    # ---- global average pool + tiny SE MLP on the VPU (off the MXU FIFO) -----
    pooled = jnp.mean(feat2, axis=0, keepdims=True)          # (1, 4C)
    sew = sew_ref[...]                                       # (2, Cr, 4C)
    seb = seb_ref[...]                                       # (2, 4C)
    hid = jnp.concatenate(
        [jnp.sum(pooled * sew[0, j], axis=-1, keepdims=True) for j in range(Cr)],
        axis=-1)                                             # (1, Cr)
    hid = jnp.maximum(hid + seb[0, :Cr], 0.0)
    se = seb[1:2]                                            # (1, 4C)
    for j in range(Cr):
        se = se + hid[:, j:j + 1] * sew[1, j]
    se = jnp.maximum(se, 0.0)                                # (1, 4C)

    # ---- packed SE rescale + merge the two branches ---------------------------
    r = feat2 * se                                           # (HW, 4C)
    ga = r[:, 0:C] + r[:, C2:C2 + C]                         # f1a' + f2a'
    gb = r[:, C:C2] + r[:, C2 + C:]                          # f1b' + f2b'
    g = jnp.concatenate([ga, gb], axis=-1)                   # (HW, 2C)

    # ---- 1x1 ConvBNAct: ONE (HW, 2C) x (2C, 2C) matmul, BN + ReLU epilogue ---
    h = jnp.dot(g, wp_ref[...], preferred_element_type=jnp.float32)
    h = jnp.maximum(h * pwsb_ref[0] + pwsb_ref[1], 0.0)      # (HW, 2C)

    # ---- fused classifier|regressor head, lane-dense 128-wide output ---------
    out = jnp.dot(h, wh_ref[...], preferred_element_type=jnp.float32) + bh_ref[...]
    out_ref[0] = out.astype(out_ref.dtype)


# -----------------------------------------------------------------------------
# Parameter packing: 17 logical tensors -> 8 wide arrays.
# -----------------------------------------------------------------------------
def pack_params(params, num_classes):
    (w3, s1, b1, w5, s2, b2, sew1, seb1, sew2, seb2,
     wp, sp, bp, wc, bc, wr, br) = params
    C2 = w3.shape[-1]
    C = C2 // 2
    Cr, C4 = sew2.shape
    assert num_classes + 4 <= NOUT

    # (25, 4C) packed depthwise taps: columns [w3a | w3b | w5a | w5b]; the 3x3
    # weights sit on the inner 3x3 of the pad-2 5x5 window, zero elsewhere.
    dwt = jnp.zeros((25, C4), jnp.float32).at[:, C2:].set(w5.reshape(25, C2))
    w3r = w3.reshape(9, C2)
    for a in range(3):
        for b in range(3):
            dwt = dwt.at[(a + 1) * 5 + (b + 1), :C2].set(w3r[a * 3 + b])

    bn = jnp.stack([jnp.concatenate([s1, s2]),                  # (2, 4C)
                    jnp.concatenate([b1, b2])])
    sew = jnp.stack([sew1.T, sew2])                             # (2, Cr, 4C)
    seb = jnp.stack([jnp.zeros((C4,), jnp.float32).at[:Cr].set(seb1), seb2])
    pwsb = jnp.stack([sp, bp])                                  # (2, 2C)

    # classifier | regressor fused and zero-padded to a lane-dense 128-wide head
    wh = jnp.zeros((C2, NOUT), jnp.float32)
    wh = wh.at[:, :num_classes].set(wc).at[:, num_classes:num_classes + 4].set(wr)
    bh = jnp.zeros((1, NOUT), jnp.float32)
    bh = bh.at[0, :num_classes].set(bc).at[0, num_classes:num_classes + 4].set(br)
    return dwt, bn, sew, seb, wp, pwsb, wh, bh


# -----------------------------------------------------------------------------
# Wrapper: layout plumbing + pallas_call with a parallel batch grid.
# -----------------------------------------------------------------------------
def dsh_forward(x_nchw, params, num_classes):
    x = jnp.transpose(x_nchw, (0, 2, 3, 1)).astype(jnp.float32)   # NCHW -> NHWC
    B, H, W, C = x.shape
    assert (H * W) % 8 == 0
    packed = pack_params(params, num_classes)

    def full_spec(a):
        return pl.BlockSpec(a.shape, lambda b, nd=a.ndim: (0,) * nd)

    out = pl.pallas_call(
        _head_kernel,
        out_shape=jax.ShapeDtypeStruct((B, H * W, NOUT), jnp.float32),
        grid_spec=pltpu.PrefetchScalarGridSpec(
            num_scalar_prefetch=0,
            grid=(B,),
            in_specs=[pl.BlockSpec((1, H, W, C), lambda b: (b, 0, 0, 0))]
                     + [full_spec(a) for a in packed],
            out_specs=pl.BlockSpec((1, H * W, NOUT), lambda b: (b, 0, 0)),
            scratch_shapes=[pltpu.VMEM((H + 4, W + 4, 4 * C), jnp.float32)]),
        compiler_params=pltpu.CompilerParams(
            dimension_semantics=("parallel",)),
    )(x, *packed)

    out = out.reshape(B, H, W, NOUT)
    return out[..., :num_classes], out[..., num_classes:num_classes + 4]


# -----------------------------------------------------------------------------
# Deterministic synthetic parameters (shapes implied by the module __init__).
# -----------------------------------------------------------------------------
def init_params(key, in_channels, num_classes):
    C = in_channels
    C2, C4, Cr = 2 * C, 4 * C, C // 8
    keys = jax.random.split(key, 12)

    def bn_fold(k, n):
        gamma = 1.0 + 0.1 * jax.random.normal(k, (n,), jnp.float32)
        beta = 0.05 * jax.random.normal(jax.random.fold_in(k, 1), (n,), jnp.float32)
        mean = 0.1 * jax.random.normal(jax.random.fold_in(k, 2), (n,), jnp.float32)
        var = jnp.abs(1.0 + 0.1 * jax.random.normal(jax.random.fold_in(k, 3), (n,), jnp.float32))
        scale = gamma / jnp.sqrt(var + 1e-5)
        bias = beta - mean * scale
        return scale, bias

    w3 = 0.2 * jax.random.normal(keys[0], (3, 3, C2), jnp.float32)      # dws k=3
    s1, b1 = bn_fold(keys[1], C2)
    w5 = 0.1 * jax.random.normal(keys[2], (5, 5, C2), jnp.float32)      # dws k=5
    s2, b2 = bn_fold(keys[3], C2)
    sew1 = 0.2 * jax.random.normal(keys[4], (C4, Cr), jnp.float32)      # Linear(4C, C//8)
    seb1 = 0.05 * jax.random.normal(keys[5], (Cr,), jnp.float32)
    sew2 = 0.2 * jax.random.normal(keys[6], (Cr, C4), jnp.float32)      # Linear(C//8, 4C)
    seb2 = 0.05 * jax.random.normal(keys[7], (C4,), jnp.float32)
    wp = 0.2 * jax.random.normal(keys[8], (C2, C2), jnp.float32)        # 1x1 ConvBNAct
    sp, bp = bn_fold(keys[9], C2)
    wc = 0.2 * jax.random.normal(keys[10], (C2, num_classes), jnp.float32)  # classifier
    bc = 0.05 * jax.random.normal(jax.random.fold_in(keys[10], 1), (num_classes,), jnp.float32)
    wr = 0.2 * jax.random.normal(keys[11], (C2, 4), jnp.float32)        # regressor
    br = 0.05 * jax.random.normal(jax.random.fold_in(keys[11], 1), (4,), jnp.float32)
    return (w3, s1, b1, w5, s2, b2, sew1, seb1, sew2, seb2,
            wp, sp, bp, wc, bc, wr, br)


# -----------------------------------------------------------------------------
# Pure-JAX reference (lax depthwise conv) for correctness checking.
# -----------------------------------------------------------------------------
def reference(x_nchw, params, num_classes):
    x = jnp.transpose(x_nchw, (0, 2, 3, 1)).astype(jnp.float32)
    B, H, W, C = x.shape
    C2 = 2 * C
    (w3, s1, b1, w5, s2, b2, sew1, seb1, sew2, seb2,
     wp, sp, bp, wc, bc, wr, br) = params

    xdup = jnp.concatenate([x, x], axis=-1)
    dn = ('NHWC', 'HWIO', 'NHWC')
    f1 = lax.conv_general_dilated(xdup, w3.reshape(3, 3, 1, C2), (1, 1), 'SAME',
                                  dimension_numbers=dn, feature_group_count=C2)
    f1 = jax.nn.relu(f1 * s1 + b1)
    f2 = lax.conv_general_dilated(xdup, w5.reshape(5, 5, 1, C2), (1, 1), 'SAME',
                                  dimension_numbers=dn, feature_group_count=C2)
    f2 = jax.nn.relu(f2 * s2 + b2)

    pooled = jnp.concatenate([f1.mean(axis=(1, 2)), f2.mean(axis=(1, 2))], axis=-1)
    hid = jax.nn.relu(pooled @ sew1 + seb1)
    se = jax.nn.relu(hid @ sew2 + seb2)

    g = f1 * se[:, None, None, :C2] + f2 * se[:, None, None, C2:]
    h = jax.nn.relu(jnp.einsum('bhwc,cd->bhwd', g, wp) * sp + bp)
    cls = jnp.einsum('bhwc,cd->bhwd', h, wc) + bc
    box = jnp.einsum('bhwc,cd->bhwd', h, wr) + br
    return cls, box


# -----------------------------------------------------------------------------
if __name__ == "__main__":
    B, C, H, W = 2, 16, 8, 8          # in_channels=16 so that C // 8 = 2 in the SE block
    NUM_CLASSES = 6

    x_nchw = jax.random.normal(jax.random.PRNGKey(0), (B, C, H, W), jnp.float32)
    params = init_params(jax.random.PRNGKey(42), C, NUM_CLASSES)

    fwd = jax.jit(dsh_forward, static_argnums=2)
    cls_out, box_out = fwd(x_nchw, params, NUM_CLASSES)
    jax.block_until_ready((cls_out, box_out))

    cls_ref, box_ref = reference(x_nchw, params, NUM_CLASSES)
    assert cls_out.shape == (B, H, W, NUM_CLASSES) and box_out.shape == (B, H, W, 4)
    assert jnp.allclose(cls_out, cls_ref, rtol=1e-4, atol=1e-4), "classifier mismatch"
    assert jnp.allclose(box_out, box_ref, rtol=1e-4, atol=1e-4), "regressor mismatch"

    print("KERNEL_OK")
</pallas_src>

<mosaic_0001>
module attributes {stable_mosaic.version = 11 : i64} {
  func.func @_head_kernel(%arg0: i32, %arg1: memref<1x8x8x16xf32, #tpu.memory_space<vmem>>, %arg2: memref<25x64xf32, #tpu.memory_space<vmem>>, %arg3: memref<2x64xf32, #tpu.memory_space<vmem>>, %arg4: memref<2x2x64xf32, #tpu.memory_space<vmem>>, %arg5: memref<2x64xf32, #tpu.memory_space<vmem>>, %arg6: memref<32x32xf32, #tpu.memory_space<vmem>>, %arg7: memref<2x32xf32, #tpu.memory_space<vmem>>, %arg8: memref<32x128xf32, #tpu.memory_space<vmem>>, %arg9: memref<1x128xf32, #tpu.memory_space<vmem>>, %arg10: memref<1x64x128xf32, #tpu.memory_space<vmem>>, %arg11: memref<12x12x64xf32, #tpu.memory_space<vmem>>) attributes {dimension_semantics = [#tpu.dimension_semantics<parallel>], iteration_bounds = array<i64: 2>, scalar_prefetch = 0 : i64, scratch_operands = 1 : i64, tpu.core_type = #tpu.core_type<tc>, window_params = [{transform_indices = @transform_0, window_bounds = array<i64: 1, 8, 8, 16>}, {pipeline_mode = #tpu.pipeline_mode<synchronous>, transform_indices = @transform_1, window_bounds = array<i64: 25, 64>}, {pipeline_mode = #tpu.pipeline_mode<synchronous>, transform_indices = @transform_2, window_bounds = array<i64: 2, 64>}, {pipeline_mode = #tpu.pipeline_mode<synchronous>, transform_indices = @transform_3, window_bounds = array<i64: 2, 2, 64>}, {pipeline_mode = #tpu.pipeline_mode<synchronous>, transform_indices = @transform_4, window_bounds = array<i64: 2, 64>}, {pipeline_mode = #tpu.pipeline_mode<synchronous>, transform_indices = @transform_5, window_bounds = array<i64: 32, 32>}, {pipeline_mode = #tpu.pipeline_mode<synchronous>, transform_indices = @transform_6, window_bounds = array<i64: 2, 32>}, {pipeline_mode = #tpu.pipeline_mode<synchronous>, transform_indices = @transform_7, window_bounds = array<i64: 32, 128>}, {pipeline_mode = #tpu.pipeline_mode<synchronous>, transform_indices = @transform_8, window_bounds = array<i64: 1, 128>}, {transform_indices = @transform_9, window_bounds = array<i64: 1, 64, 128>}]} {
    %cst = arith.constant 0.000000e+00 : f32
    %0 = vector.broadcast %cst : f32 to vector<2x12x64xf32>
    %c0 = arith.constant 0 : index
    %c0_0 = arith.constant 0 : index
    %c0_1 = arith.constant 0 : index
    %1 = vector.load %arg11[%c0, %c0_0, %c0_1] : memref<12x12x64xf32, #tpu.memory_space<vmem>>, vector<2x12x64xf32>
    tpu.vector_store %arg11[%c0, %c0_0, %c0_1], %0 {strides = array<i32>} : memref<12x12x64xf32, #tpu.memory_space<vmem>>, vector<2x12x64xf32>,
    %cst_2 = arith.constant 0.000000e+00 : f32
    %2 = vector.broadcast %cst_2 : f32 to vector<2x12x64xf32>
    %c10 = arith.constant 10 : index
    %c0_3 = arith.constant 0 : index
    %c0_4 = arith.constant 0 : index
    %3 = vector.load %arg11[%c10, %c0_3, %c0_4] : memref<12x12x64xf32, #tpu.memory_space<vmem>>, vector<2x12x64xf32>
    tpu.vector_store %arg11[%c10, %c0_3, %c0_4], %2 {strides = array<i32>} : memref<12x12x64xf32, #tpu.memory_space<vmem>>, vector<2x12x64xf32>,
    %cst_5 = arith.constant 0.000000e+00 : f32
    %4 = vector.broadcast %cst_5 : f32 to vector<8x2x64xf32>
    %c2 = arith.constant 2 : index
    %c0_6 = arith.constant 0 : index
    %c0_7 = arith.constant 0 : index
    %5 = vector.load %arg11[%c2, %c0_6, %c0_7] : memref<12x12x64xf32, #tpu.memory_space<vmem>>, vector<8x2x64xf32>
    tpu.vector_store %arg11[%c2, %c0_6, %c0_7], %4 {strides = array<i32>} : memref<12x12x64xf32, #tpu.memory_space<vmem>>, vector<8x2x64xf32>,
    %cst_8 = arith.constant 0.000000e+00 : f32
    %6 = vector.broadcast %cst_8 : f32 to vector<8x2x64xf32>
    %c2_9 = arith.constant 2 : index
    %c10_10 = arith.constant 10 : index
    %c0_11 = arith.constant 0 : index
    %7 = vector.load %arg11[%c2_9, %c10_10, %c0_11] : memref<12x12x64xf32, #tpu.memory_space<vmem>>, vector<8x2x64xf32>
    tpu.vector_store %arg11[%c2_9, %c10_10, %c0_11], %6 {strides = array<i32>} : memref<12x12x64xf32, #tpu.memory_space<vmem>>, vector<8x2x64xf32>,
    %c0_12 = arith.constant 0 : index
    %c0_13 = arith.constant 0 : index
    %c0_14 = arith.constant 0 : index
    %c0_15 = arith.constant 0 : index
    %8 = vector.load %arg1[%c0_12, %c0_13, %c0_14, %c0_15] : memref<1x8x8x16xf32, #tpu.memory_space<vmem>>, vector<1x8x8x16xf32>
    %9 = vector.shape_cast %8 : vector<1x8x8x16xf32> to vector<8x8x16xf32>
    %10 = tpu.concatenate %9, %9, %9, %9 in 2 : vector<8x8x16xf32>, vector<8x8x16xf32>, vector<8x8x16xf32>, vector<8x8x16xf32> -> vector<8x8x64xf32>
    %c2_16 = arith.constant 2 : index
    %c2_17 = arith.constant 2 : index
    %c0_18 = arith.constant 0 : index
    %11 = vector.load %arg11[%c2_16, %c2_17, %c0_18] : memref<12x12x64xf32, #tpu.memory_space<vmem>>, vector<8x8x64xf32>
    tpu.vector_store %arg11[%c2_16, %c2_17, %c0_18], %10 {strides = array<i32>} : memref<12x12x64xf32, #tpu.memory_space<vmem>>, vector<8x8x64xf32>,
    %c0_19 = arith.constant 0 : index
    %c0_20 = arith.constant 0 : index
    %12 = vector.load %arg2[%c0_19, %c0_20] : memref<25x64xf32, #tpu.memory_space<vmem>>, vector<25x64xf32>
    %cst_21 = arith.constant 0.000000e+00 : f32
    %13 = vector.broadcast %cst_21 : f32 to vector<8x8x64xf32>
    %c0_22 = arith.constant 0 : index
    %c0_23 = arith.constant 0 : index
    %c0_24 = arith.constant 0 : index
    %14 = vector.load %arg11[%c0_22, %c0_23, %c0_24] : memref<12x12x64xf32, #tpu.memory_space<vmem>>, vector<8x8x64xf32>
    %15 = vector.extract_strided_slice %12 {offsets = [0, 0], sizes = [1, 64], strides = [1, 1]} : vector<25x64xf32> to vector<1x64xf32>
    %16 = vector.shape_cast %15 : vector<1x64xf32> to vector<64xf32>
    %17 = vector.shape_cast %16 : vector<64xf32> to vector<1x1x64xf32>
    %18 = vector.broadcast %17 : vector<1x1x64xf32> to vector<8x8x64xf32>
    %19 = arith.mulf %14, %18 : vector<8x8x64xf32>
    %20 = arith.addf %13, %19 : vector<8x8x64xf32>
    %c0_25 = arith.constant 0 : index
    %c1 = arith.constant 1 : index
    %c0_26 = arith.constant 0 : index
    %21 = vector.load %arg11[%c0_25, %c1, %c0_26] : memref<12x12x64xf32, #tpu.memory_space<vmem>>, vector<8x8x64xf32>
    %22 = vector.extract_strided_slice %12 {offsets = [1, 0], sizes = [1, 64], strides = [1, 1]} : vector<25x64xf32> to vector<1x64xf32>
    %23 = vector.shape_cast %22 : vector<1x64xf32> to vector<64xf32>
    %24 = vector.shape_cast %23 : vector<64xf32> to vector<1x1x64xf32>
    %25 = vector.broadcast %24 : vector<1x1x64xf32> to vector<8x8x64xf32>
    %26 = arith.mulf %21, %25 : vector<8x8x64xf32>
    %27 = arith.addf %20, %26 : vector<8x8x64xf32>
    %c0_27 = arith.constant 0 : index
    %c2_28 = arith.constant 2 : index
    %c0_29 = arith.constant 0 : index
    %28 = vector.load %arg11[%c0_27, %c2_28, %c0_29] : memref<12x12x64xf32, #tpu.memory_space<vmem>>, vector<8x8x64xf32>
    %29 = vector.extract_strided_slice %12 {offsets = [2, 0], sizes = [1, 64], strides = [1, 1]} : vector<25x64xf32> to vector<1x64xf32>
    %30 = vector.shape_cast %29 : vector<1x64xf32> to vector<64xf32>
    %31 = vector.shape_cast %30 : vector<64xf32> to vector<1x1x64xf32>
    %32 = vector.broadcast %31 : vector<1x1x64xf32> to vector<8x8x64xf32>
    %33 = arith.mulf %28, %32 : vector<8x8x64xf32>
    %34 = arith.addf %27, %33 : vector<8x8x64xf32>
    %c0_30 = arith.constant 0 : index
    %c3 = arith.constant 3 : index
    %c0_31 = arith.constant 0 : index
    %35 = vector.load %arg11[%c0_30, %c3, %c0_31] : memref<12x12x64xf32, #tpu.memory_space<vmem>>, vector<8x8x64xf32>
    %36 = vector.extract_strided_slice %12 {offsets = [3, 0], sizes = [1, 64], strides = [1, 1]} : vector<25x64xf32> to vector<1x64xf32>
    %37 = vector.shape_cast %36 : vector<1x64xf32> to vector<64xf32>
    %38 = vector.shape_cast %37 : vector<64xf32> to vector<1x1x64xf32>
    %39 = vector.broadcast %38 : vector<1x1x64xf32> to vector<8x8x64xf32>
    %40 = arith.mulf %35, %39 : vector<8x8x64xf32>
    %41 = arith.addf %34, %40 : vector<8x8x64xf32>
    %c0_32 = arith.constant 0 : index
    %c4 = arith.constant 4 : index
    %c0_33 = arith.constant 0 : index
    %42 = vector.load %arg11[%c0_32, %c4, %c0_33] : memref<12x12x64xf32, #tpu.memory_space<vmem>>, vector<8x8x64xf32>
    %43 = vector.extract_strided_slice %12 {offsets = [4, 0], sizes = [1, 64], strides = [1, 1]} : vector<25x64xf32> to vector<1x64xf32>
    %44 = vector.shape_cast %43 : vector<1x64xf32> to vector<64xf32>
    %45 = vector.shape_cast %44 : vector<64xf32> to vector<1x1x64xf32>
    %46 = vector.broadcast %45 : vector<1x1x64xf32> to vector<8x8x64xf32>
    %47 = arith.mulf %42, %46 : vector<8x8x64xf32>
    %48 = arith.addf %41, %47 : vector<8x8x64xf32>
    %c1_34 = arith.constant 1 : index
    %c0_35 = arith.constant 0 : index
    %c0_36 = arith.constant 0 : index
    %49 = vector.load %arg11[%c1_34, %c0_35, %c0_36] : memref<12x12x64xf32, #tpu.memory_space<vmem>>, vector<8x8x64xf32>
    %50 = vector.extract_strided_slice %12 {offsets = [5, 0], sizes = [1, 64], strides = [1, 1]} : vector<25x64xf32> to vector<1x64xf32>
    %51 = vector.shape_cast %50 : vector<1x64xf32> to vector<64xf32>
    %52 = vector.shape_cast %51 : vector<64xf32> to vector<1x1x64xf32>
    %53 = vector.broadcast %52 : vector<1x1x64xf32> to vector<8x8x64xf32>
    %54 = arith.mulf %49, %53 : vector<8x8x64xf32>
    %55 = arith.addf %48, %54 : vector<8x8x64xf32>
    %c1_37 = arith.constant 1 : index
    %c1_38 = arith.constant 1 : index
    %c0_39 = arith.constant 0 : index
    %56 = vector.load %arg11[%c1_37, %c1_38, %c0_39] : memref<12x12x64xf32, #tpu.memory_space<vmem>>, vector<8x8x64xf32>
    %57 = vector.extract_strided_slice %12 {offsets = [6, 0], sizes = [1, 64], strides = [1, 1]} : vector<25x64xf32> to vector<1x64xf32>
    %58 = vector.shape_cast %57 : vector<1x64xf32> to vector<64xf32>
    %59 = vector.shape_cast %58 : vector<64xf32> to vector<1x1x64xf32>
    %60 = vector.broadcast %59 : vector<1x1x64xf32> to vector<8x8x64xf32>
    %61 = arith.mulf %56, %60 : vector<8x8x64xf32>
    %62 = arith.addf %55, %61 : vector<8x8x64xf32>
    %c1_40 = arith.constant 1 : index
    %c2_41 = arith.constant 2 : index
    %c0_42 = arith.constant 0 : index
    %63 = vector.load %arg11[%c1_40, %c2_41, %c0_42] : memref<12x12x64xf32, #tpu.memory_space<vmem>>, vector<8x8x64xf32>
    %64 = vector.extract_strided_slice %12 {offsets = [7, 0], sizes = [1, 64], strides = [1, 1]} : vector<25x64xf32> to vector<1x64xf32>
    %65 = vector.shape_cast %64 : vector<1x64xf32> to vector<64xf32>
    %66 = vector.shape_cast %65 : vector<64xf32> to vector<1x1x64xf32>
    %67 = vector.broadcast %66 : vector<1x1x64xf32> to vector<8x8x64xf32>
    %68 = arith.mulf %63, %67 : vector<8x8x64xf32>
    %69 = arith.addf %62, %68 : vector<8x8x64xf32>
    %c1_43 = arith.constant 1 : index
    %c3_44 = arith.constant 3 : index
    %c0_45 = arith.constant 0 : index
    %70 = vector.load %arg11[%c1_43, %c3_44, %c0_45] : memref<12x12x64xf32, #tpu.memory_space<vmem>>, vector<8x8x64xf32>
    %71 = vector.extract_strided_slice %12 {offsets = [8, 0], sizes = [1, 64], strides = [1, 1]} : vector<25x64xf32> to vector<1x64xf32>
    %72 = vector.shape_cast %71 : vector<1x64xf32> to vector<64xf32>
    %73 = vector.shape_cast %72 : vector<64xf32> to vector<1x1x64xf32>
    %74 = vector.broadcast %73 : vector<1x1x64xf32> to vector<8x8x64xf32>
    %75 = arith.mulf %70, %74 : vector<8x8x64xf32>
    %76 = arith.addf %69, %75 : vector<8x8x64xf32>
    %c1_46 = arith.constant 1 : index
    %c4_47 = arith.constant 4 : index
    %c0_48 = arith.constant 0 : index
    %77 = vector.load %arg11[%c1_46, %c4_47, %c0_48] : memref<12x12x64xf32, #tpu.memory_space<vmem>>, vector<8x8x64xf32>
    %78 = vector.extract_strided_slice %12 {offsets = [9, 0], sizes = [1, 64], strides = [1, 1]} : vector<25x64xf32> to vector<1x64xf32>
    %79 = vector.shape_cast %78 : vector<1x64xf32> to vector<64xf32>
    %80 = vector.shape_cast %79 : vector<64xf32> to vector<1x1x64xf32>
    %81 = vector.broadcast %80 : vector<1x1x64xf32> to vector<8x8x64xf32>
    %82 = arith.mulf %77, %81 : vector<8x8x64xf32>
    %83 = arith.addf %76, %82 : vector<8x8x64xf32>
    %c2_49 = arith.constant 2 : index
    %c0_50 = arith.constant 0 : index
    %c0_51 = arith.constant 0 : index
    %84 = vector.load %arg11[%c2_49, %c0_50, %c0_51] : memref<12x12x64xf32, #tpu.memory_space<vmem>>, vector<8x8x64xf32>
    %85 = vector.extract_strided_slice %12 {offsets = [10, 0], sizes = [1, 64], strides = [1, 1]} : vector<25x64xf32> to vector<1x64xf32>
    %86 = vector.shape_cast %85 : vector<1x64xf32> to vector<64xf32>
    %87 = vector.shape_cast %86 : vector<64xf32> to vector<1x1x64xf32>
    %88 = vector.broadcast %87 : vector<1x1x64xf32> to vector<8x8x64xf32>
    %89 = arith.mulf %84, %88 : vector<8x8x64xf32>
    %90 = arith.addf %83, %89 : vector<8x8x64xf32>
    %c2_52 = arith.constant 2 : index
    %c1_53 = arith.constant 1 : index
    %c0_54 = arith.constant 0 : index
    %91 = vector.load %arg11[%c2_52, %c1_53, %c0_54] : memref<12x12x64xf32, #tpu.memory_space<vmem>>, vector<8x8x64xf32>
    %92 = vector.extract_strided_slice %12 {offsets = [11, 0], sizes = [1, 64], strides = [1, 1]} : vector<25x64xf32> to vector<1x64xf32>
    %93 = vector.shape_cast %92 : vector<1x64xf32> to vector<64xf32>
    %94 = vector.shape_cast %93 : vector<64xf32> to vector<1x1x64xf32>
    %95 = vector.broadcast %94 : vector<1x1x64xf32> to vector<8x8x64xf32>
    %96 = arith.mulf %91, %95 : vector<8x8x64xf32>
    %97 = arith.addf %90, %96 : vector<8x8x64xf32>
    %c2_55 = arith.constant 2 : index
    %c2_56 = arith.constant 2 : index
    %c0_57 = arith.constant 0 : index
    %98 = vector.load %arg11[%c2_55, %c2_56, %c0_57] : memref<12x12x64xf32, #tpu.memory_space<vmem>>, vector<8x8x64xf32>
    %99 = vector.extract_strided_slice %12 {offsets = [12, 0], sizes = [1, 64], strides = [1, 1]} : vector<25x64xf32> to vector<1x64xf32>
    %100 = vector.shape_cast %99 : vector<1x64xf32> to vector<64xf32>
    %101 = vector.shape_cast %100 : vector<64xf32> to vector<1x1x64xf32>
    %102 = vector.broadcast %101 : vector<1x1x64xf32> to vector<8x8x64xf32>
    %103 = arith.mulf %98, %102 : vector<8x8x64xf32>
    %104 = arith.addf %97, %103 : vector<8x8x64xf32>
    %c2_58 = arith.constant 2 : index
    %c3_59 = arith.constant 3 : index
    %c0_60 = arith.constant 0 : index
    %105 = vector.load %arg11[%c2_58, %c3_59, %c0_60] : memref<12x12x64xf32, #tpu.memory_space<vmem>>, vector<8x8x64xf32>
    %106 = vector.extract_strided_slice %12 {offsets = [13, 0], sizes = [1, 64], strides = [1, 1]} : vector<25x64xf32> to vector<1x64xf32>
    %107 = vector.shape_cast %106 : vector<1x64xf32> to vector<64xf32>
    %108 = vector.shape_cast %107 : vector<64xf32> to vector<1x1x64xf32>
    %109 = vector.broadcast %108 : vector<1x1x64xf32> to vector<8x8x64xf32>
    %110 = arith.mulf %105, %109 : vector<8x8x64xf32>
    %111 = arith.addf %104, %110 : vector<8x8x64xf32>
    %c2_61 = arith.constant 2 : index
    %c4_62 = arith.constant 4 : index
    %c0_63 = arith.constant 0 : index
    %112 = vector.load %arg11[%c2_61, %c4_62, %c0_63] : memref<12x12x64xf32, #tpu.memory_space<vmem>>, vector<8x8x64xf32>
    %113 = vector.extract_strided_slice %12 {offsets = [14, 0], sizes = [1, 64], strides = [1, 1]} : vector<25x64xf32> to vector<1x64xf32>
    %114 = vector.shape_cast %113 : vector<1x64xf32> to vector<64xf32>
    %115 = vector.shape_cast %114 : vector<64xf32> to vector<1x1x64xf32>
    %116 = vector.broadcast %115 : vector<1x1x64xf32> to vector<8x8x64xf32>
    %117 = arith.mulf %112, %116 : vector<8x8x64xf32>
    %118 = arith.addf %111, %117 : vector<8x8x64xf32>
    %c3_64 = arith.constant 3 : index
    %c0_65 = arith.constant 0 : index
    %c0_66 = arith.constant 0 : index
    %119 = vector.load %arg11[%c3_64, %c0_65, %c0_66] : memref<12x12x64xf32, #tpu.memory_space<vmem>>, vector<8x8x64xf32>
    %120 = vector.extract_strided_slice %12 {offsets = [15, 0], sizes = [1, 64], strides = [1, 1]} : vector<25x64xf32> to vector<1x64xf32>
    %121 = vector.shape_cast %120 : vector<1x64xf32> to vector<64xf32>
    %122 = vector.shape_cast %121 : vector<64xf32> to vector<1x1x64xf32>
    %123 = vector.broadcast %122 : vector<1x1x64xf32> to vector<8x8x64xf32>
    %124 = arith.mulf %119, %123 : vector<8x8x64xf32>
    %125 = arith.addf %118, %124 : vector<8x8x64xf32>
    %c3_67 = arith.constant 3 : index
    %c1_68 = arith.constant 1 : index
    %c0_69 = arith.constant 0 : index
    %126 = vector.load %arg11[%c3_67, %c1_68, %c0_69] : memref<12x12x64xf32, #tpu.memory_space<vmem>>, vector<8x8x64xf32>
    %127 = vector.extract_strided_slice %12 {offsets = [16, 0], sizes = [1, 64], strides = [1, 1]} : vector<25x64xf32> to vector<1x64xf32>
    %128 = vector.shape_cast %127 : vector<1x64xf32> to vector<64xf32>
    %129 = vector.shape_cast %128 : vector<64xf32> to vector<1x1x64xf32>
    %130 = vector.broadcast %129 : vector<1x1x64xf32> to vector<8x8x64xf32>
    %131 = arith.mulf %126, %130 : vector<8x8x64xf32>
    %132 = arith.addf %125, %131 : vector<8x8x64xf32>
    %c3_70 = arith.constant 3 : index
    %c2_71 = arith.constant 2 : index
    %c0_72 = arith.constant 0 : index
    %133 = vector.load %arg11[%c3_70, %c2_71, %c0_72] : memref<12x12x64xf32, #tpu.memory_space<vmem>>, vector<8x8x64xf32>
    %134 = vector.extract_strided_slice %12 {offsets = [17, 0], sizes = [1, 64], strides = [1, 1]} : vector<25x64xf32> to vector<1x64xf32>
    %135 = vector.shape_cast %134 : vector<1x64xf32> to vector<64xf32>
    %136 = vector.shape_cast %135 : vector<64xf32> to vector<1x1x64xf32>
    %137 = vector.broadcast %136 : vector<1x1x64xf32> to vector<8x8x64xf32>
    %138 = arith.mulf %133, %137 : vector<8x8x64xf32>
    %139 = arith.addf %132, %138 : vector<8x8x64xf32>
    %c3_73 = arith.constant 3 : index
    %c3_74 = arith.constant 3 : index
    %c0_75 = arith.constant 0 : index
    %140 = vector.load %arg11[%c3_73, %c3_74, %c0_75] : memref<12x12x64xf32, #tpu.memory_space<vmem>>, vector<8x8x64xf32>
    %141 = vector.extract_strided_slice %12 {offsets = [18, 0], sizes = [1, 64], strides = [1, 1]} : vector<25x64xf32> to vector<1x64xf32>
    %142 = vector.shape_cast %141 : vector<1x64xf32> to vector<64xf32>
    %143 = vector.shape_cast %142 : vector<64xf32> to vector<1x1x64xf32>
    %144 = vector.broadcast %143 : vector<1x1x64xf32> to vector<8x8x64xf32>
    %145 = arith.mulf %140, %144 : vector<8x8x64xf32>
    %146 = arith.addf %139, %145 : vector<8x8x64xf32>
    %c3_76 = arith.constant 3 : index
    %c4_77 = arith.constant 4 : index
    %c0_78 = arith.constant 0 : index
    %147 = vector.load %arg11[%c3_76, %c4_77, %c0_78] : memref<12x12x64xf32, #tpu.memory_space<vmem>>, vector<8x8x64xf32>
    %148 = vector.extract_strided_slice %12 {offsets = [19, 0], sizes = [1, 64], strides = [1, 1]} : vector<25x64xf32> to vector<1x64xf32>
    %149 = vector.shape_cast %148 : vector<1x64xf32> to vector<64xf32>
    %150 = vector.shape_cast %149 : vector<64xf32> to vector<1x1x64xf32>
    %151 = vector.broadcast %150 : vector<1x1x64xf32> to vector<8x8x64xf32>
    %152 = arith.mulf %147, %151 : vector<8x8x64xf32>
    %153 = arith.addf %146, %152 : vector<8x8x64xf32>
    %c4_79 = arith.constant 4 : index
    %c0_80 = arith.constant 0 : index
    %c0_81 = arith.constant 0 : index
    %154 = vector.load %arg11[%c4_79, %c0_80, %c0_81] : memref<12x12x64xf32, #tpu.memory_space<vmem>>, vector<8x8x64xf32>
    %155 = vector.extract_strided_slice %12 {offsets = [20, 0], sizes = [1, 64], strides = [1, 1]} : vector<25x64xf32> to vector<1x64xf32>
    %156 = vector.shape_cast %155 : vector<1x64xf32> to vector<64xf32>
    %157 = vector.shape_cast %156 : vector<64xf32> to vector<1x1x64xf32>
    %158 = vector.broadcast %157 : vector<1x1x64xf32> to vector<8x8x64xf32>
    %159 = arith.mulf %154, %158 : vector<8x8x64xf32>
    %160 = arith.addf %153, %159 : vector<8x8x64xf32>
    %c4_82 = arith.constant 4 : index
    %c1_83 = arith.constant 1 : index
    %c0_84 = arith.constant 0 : index
    %161 = vector.load %arg11[%c4_82, %c1_83, %c0_84] : memref<12x12x64xf32, #tpu.memory_space<vmem>>, vector<8x8x64xf32>
    %162 = vector.extract_strided_slice %12 {offsets = [21, 0], sizes = [1, 64], strides = [1, 1]} : vector<25x64xf32> to vector<1x64xf32>
    %163 = vector.shape_cast %162 : vector<1x64xf32> to vector<64xf32>
    %164 = vector.shape_cast %163 : vector<64xf32> to vector<1x1x64xf32>
    %165 = vector.broadcast %164 : vector<1x1x64xf32> to vector<8x8x64xf32>
    %166 = arith.mulf %161, %165 : vector<8x8x64xf32>
    %167 = arith.addf %160, %166 : vector<8x8x64xf32>
    %c4_85 = arith.constant 4 : index
    %c2_86 = arith.constant 2 : index
    %c0_87 = arith.constant 0 : index
    %168 = vector.load %arg11[%c4_85, %c2_86, %c0_87] : memref<12x12x64xf32, #tpu.memory_space<vmem>>, vector<8x8x64xf32>
    %169 = vector.extract_strided_slice %12 {offsets = [22, 0], sizes = [1, 64], strides = [1, 1]} : vector<25x64xf32> to vector<1x64xf32>
    %170 = vector.shape_cast %169 : vector<1x64xf32> to vector<64xf32>
    %171 = vector.shape_cast %170 : vector<64xf32> to vector<1x1x64xf32>
    %172 = vector.broadcast %171 : vector<1x1x64xf32> to vector<8x8x64xf32>
    %173 = arith.mulf %168, %172 : vector<8x8x64xf32>
    %174 = arith.addf %167, %173 : vector<8x8x64xf32>
    %c4_88 = arith.constant 4 : index
    %c3_89 = arith.constant 3 : index
    %c0_90 = arith.constant 0 : index
    %175 = vector.load %arg11[%c4_88, %c3_89, %c0_90] : memref<12x12x64xf32, #tpu.memory_space<vmem>>, vector<8x8x64xf32>
    %176 = vector.extract_strided_slice %12 {offsets = [23, 0], sizes = [1, 64], strides = [1, 1]} : vector<25x64xf32> to vector<1x64xf32>
    %177 = vector.shape_cast %176 : vector<1x64xf32> to vector<64xf32>
    %178 = vector.shape_cast %177 : vector<64xf32> to vector<1x1x64xf32>
    %179 = vector.broadcast %178 : vector<1x1x64xf32> to vector<8x8x64xf32>
    %180 = arith.mulf %175, %179 : vector<8x8x64xf32>
    %181 = arith.addf %174, %180 : vector<8x8x64xf32>
    %c4_91 = arith.constant 4 : index
    %c4_92 = arith.constant 4 : index
    %c0_93 = arith.constant 0 : index
    %182 = vector.load %arg11[%c4_91, %c4_92, %c0_93] : memref<12x12x64xf32, #tpu.memory_space<vmem>>, vector<8x8x64xf32>
    %183 = vector.extract_strided_slice %12 {offsets = [24, 0], sizes = [1, 64], strides = [1, 1]} : vector<25x64xf32> to vector<1x64xf32>
    %184 = vector.shape_cast %183 : vector<1x64xf32> to vector<64xf32>
    %185 = vector.shape_cast %184 : vector<64xf32> to vector<1x1x64xf32>
    %186 = vector.broadcast %185 : vector<1x1x64xf32> to vector<8x8x64xf32>
    %187 = arith.mulf %182, %186 : vector<8x8x64xf32>
    %188 = arith.addf %181, %187 : vector<8x8x64xf32>
    %c0_94 = arith.constant 0 : index
    %c0_95 = arith.constant 0 : index
    %189 = vector.load %arg3[%c0_94, %c0_95] : memref<2x64xf32, #tpu.memory_space<vmem>>, vector<1x64xf32>
    %190 = vector.shape_cast %189 : vector<1x64xf32> to vector<64xf32>
    %191 = vector.shape_cast %190 : vector<64xf32> to vector<1x1x64xf32>
    %192 = vector.broadcast %191 : vector<1x1x64xf32> to vector<8x8x64xf32>
    %193 = arith.mulf %188, %192 : vector<8x8x64xf32>
    %c1_96 = arith.constant 1 : index
    %c0_97 = arith.constant 0 : index
    %194 = vector.load %arg3[%c1_96, %c0_97] : memref<2x64xf32, #tpu.memory_space<vmem>>, vector<1x64xf32>
    %195 = vector.shape_cast %194 : vector<1x64xf32> to vector<64xf32>
    %196 = vector.shape_cast %195 : vector<64xf32> to vector<1x1x64xf32>
    %197 = vector.broadcast %196 : vector<1x1x64xf32> to vector<8x8x64xf32>
    %198 = arith.addf %193, %197 : vector<8x8x64xf32>
    %cst_98 = arith.constant 0.000000e+00 : f32
    %199 = vector.broadcast %cst_98 : f32 to vector<8x8x64xf32>
    %200 = arith.maximumf %198, %199 : vector<8x8x64xf32>
    %201 = vector.shape_cast %200 : vector<8x8x64xf32> to vector<64x64xf32>
    %cst_99 = arith.constant dense<0.000000e+00> : vector<64xf32>
    %202 = vector.multi_reduction <add>, %201, %cst_99 [0] : vector<64x64xf32> to vector<64xf32>
    %203 = vector.shape_cast %202 : vector<64xf32> to vector<1x64xf32>
    %cst_100 = arith.constant 6.400000e+01 : f32
    %204 = vector.broadcast %cst_100 : f32 to vector<1x64xf32>
    %205 = arith.divf %203, %204 : vector<1x64xf32>
    %c0_101 = arith.constant 0 : index
    %c0_102 = arith.constant 0 : index
    %c0_103 = arith.constant 0 : index
    %206 = vector.load %arg4[%c0_101, %c0_102, %c0_103] : memref<2x2x64xf32, #tpu.memory_space<vmem>>, vector<2x2x64xf32>
    %c0_104 = arith.constant 0 : index
    %c0_105 = arith.constant 0 : index
    %207 = vector.load %arg5[%c0_104, %c0_105] : memref<2x64xf32, #tpu.memory_space<vmem>>, vector<2x64xf32>
    %208 = vector.extract_strided_slice %206 {offsets = [0, 0, 0], sizes = [1, 1, 64], strides = [1, 1, 1]} : vector<2x2x64xf32> to vector<1x1x64xf32>
    %209 = vector.shape_cast %208 : vector<1x1x64xf32> to vector<64xf32>
    %210 = vector.shape_cast %209 : vector<64xf32> to vector<1x64xf32>
    %211 = arith.mulf %205, %210 : vector<1x64xf32>
    %cst_106 = arith.constant dense<0.000000e+00> : vector<1xf32>
    %212 = vector.multi_reduction <add>, %211, %cst_106 [1] : vector<1x64xf32> to vector<1xf32>
    %213 = vector.shape_cast %212 : vector<1xf32> to vector<1x1xf32>
    %214 = vector.extract_strided_slice %206 {offsets = [0, 1, 0], sizes = [1, 1, 64], strides = [1, 1, 1]} : vector<2x2x64xf32> to vector<1x1x64xf32>
    %215 = vector.shape_cast %214 : vector<1x1x64xf32> to vector<64xf32>
    %216 = vector.shape_cast %215 : vector<64xf32> to vector<1x64xf32>
    %217 = arith.mulf %205, %216 : vector<1x64xf32>
    %cst_107 = arith.constant dense<0.000000e+00> : vector<1xf32>
    %218 = vector.multi_reduction <add>, %217, %cst_107 [1] : vector<1x64xf32> to vector<1xf32>
    %219 = vector.shape_cast %218 : vector<1xf32> to vector<1x1xf32>
    %220 = tpu.concatenate %213, %219 in 1 : vector<1x1xf32>, vector<1x1xf32> -> vector<1x2xf32>
    %221 = vector.extract_strided_slice %207 {offsets = [0, 0], sizes = [1, 2], strides = [1, 1]} : vector<2x64xf32> to vector<1x2xf32>
    %222 = vector.shape_cast %221 : vector<1x2xf32> to vector<2xf32>
    %223 = vector.shape_cast %222 : vector<2xf32> to vector<1x2xf32>
    %224 = arith.addf %220, %223 : vector<1x2xf32>
    %cst_108 = arith.constant 0.000000e+00 : f32
    %225 = vector.broadcast %cst_108 : f32 to vector<1x2xf32>
    %226 = arith.maximumf %224, %225 : vector<1x2xf32>
    %227 = vector.extract_strided_slice %207 {offsets = [1, 0], sizes = [1, 64], strides = [1, 1]} : vector<2x64xf32> to vector<1x64xf32>
    %228 = vector.extract_strided_slice %226 {offsets = [0, 0], sizes = [1, 1], strides = [1, 1]} : vector<1x2xf32> to vector<1x1xf32>
    %229 = vector.extract_strided_slice %206 {offsets = [1, 0, 0], sizes = [1, 1, 64], strides = [1, 1, 1]} : vector<2x2x64xf32> to vector<1x1x64xf32>
    %230 = vector.shape_cast %229 : vector<1x1x64xf32> to vector<64xf32>
    %231 = vector.shape_cast %230 : vector<64xf32> to vector<1x64xf32>
    %232 = vector.broadcast %228 : vector<1x1xf32> to vector<1x64xf32>
    %233 = arith.mulf %232, %231 : vector<1x64xf32>
    %234 = arith.addf %227, %233 : vector<1x64xf32>
    %235 = vector.extract_strided_slice %226 {offsets = [0, 1], sizes = [1, 1], strides = [1, 1]} : vector<1x2xf32> to vector<1x1xf32>
    %236 = vector.extract_strided_slice %206 {offsets = [1, 1, 0], sizes = [1, 1, 64], strides = [1, 1, 1]} : vector<2x2x64xf32> to vector<1x1x64xf32>
    %237 = vector.shape_cast %236 : vector<1x1x64xf32> to vector<64xf32>
    %238 = vector.shape_cast %237 : vector<64xf32> to vector<1x64xf32>
    %239 = vector.broadcast %235 : vector<1x1xf32> to vector<1x64xf32>
    %240 = arith.mulf %239, %238 : vector<1x64xf32>
    %241 = arith.addf %234, %240 : vector<1x64xf32>
    %cst_109 = arith.constant 0.000000e+00 : f32
    %242 = vector.broadcast %cst_109 : f32 to vector<1x64xf32>
    %243 = arith.maximumf %241, %242 : vector<1x64xf32>
    %244 = vector.broadcast %243 : vector<1x64xf32> to vector<64x64xf32>
    %245 = arith.mulf %201, %244 : vector<64x64xf32>
    %246 = vector.extract_strided_slice %245 {offsets = [0, 0], sizes = [64, 16], strides = [1, 1]} : vector<64x64xf32> to vector<64x16xf32>
    %247 = vector.extract_strided_slice %245 {offsets = [0, 32], sizes = [64, 16], strides = [1, 1]} : vector<64x64xf32> to vector<64x16xf32>
    %248 = arith.addf %246, %247 : vector<64x16xf32>
    %249 = vector.extract_strided_slice %245 {offsets = [0, 16], sizes = [64, 16], strides = [1, 1]} : vector<64x64xf32> to vector<64x16xf32>
    %250 = vector.extract_strided_slice %245 {offsets = [0, 48], sizes = [64, 16], strides = [1, 1]} : vector<64x64xf32> to vector<64x16xf32>
    %251 = arith.addf %249, %250 : vector<64x16xf32>
    %252 = tpu.concatenate %248, %251 in 1 : vector<64x16xf32>, vector<64x16xf32> -> vector<64x32xf32>
    %c0_110 = arith.constant 0 : index
    %c0_111 = arith.constant 0 : index
    %253 = vector.load %arg6[%c0_110, %c0_111] : memref<32x32xf32, #tpu.memory_space<vmem>>, vector<32x32xf32>
    %cst_112 = arith.constant dense<0.000000e+00> : vector<64x32xf32>
    %254 = tpu.matmul %252, %253, %cst_112 {dimension_numbers = #tpu.dot_dimension_numbers<[1], [0], [0], [1], [0, 0, 1, 1], [], []>} : vector<64x32xf32>, vector<32x32xf32>, vector<64x32xf32> -> vector<64x32xf32>
    %c0_113 = arith.constant 0 : index
    %c0_114 = arith.constant 0 : index
    %255 = vector.load %arg7[%c0_113, %c0_114] : memref<2x32xf32, #tpu.memory_space<vmem>>, vector<1x32xf32>
    %256 = vector.shape_cast %255 : vector<1x32xf32> to vector<32xf32>
    %257 = vector.shape_cast %256 : vector<32xf32> to vector<1x32xf32>
    %258 = vector.broadcast %257 : vector<1x32xf32> to vector<64x32xf32>
    %259 = arith.mulf %254, %258 : vector<64x32xf32>
    %c1_115 = arith.constant 1 : index
    %c0_116 = arith.constant 0 : index
    %260 = vector.load %arg7[%c1_115, %c0_116] : memref<2x32xf32, #tpu.memory_space<vmem>>, vector<1x32xf32>
    %261 = vector.shape_cast %260 : vector<1x32xf32> to vector<32xf32>
    %262 = vector.shape_cast %261 : vector<32xf32> to vector<1x32xf32>
    %263 = vector.broadcast %262 : vector<1x32xf32> to vector<64x32xf32>
    %264 = arith.addf %259, %263 : vector<64x32xf32>
    %cst_117 = arith.constant 0.000000e+00 : f32
    %265 = vector.broadcast %cst_117 : f32 to vector<64x32xf32>
    %266 = arith.maximumf %264, %265 : vector<64x32xf32>
    %c0_118 = arith.constant 0 : index
    %c0_119 = arith.constant 0 : index
    %267 = vector.load %arg8[%c0_118, %c0_119] : memref<32x128xf32, #tpu.memory_space<vmem>>, vector<32x128xf32>
    %cst_120 = arith.constant dense<0.000000e+00> : vector<64x128xf32>
    %268 = tpu.matmul %266, %267, %cst_120 {dimension_numbers = #tpu.dot_dimension_numbers<[1], [0], [0], [1], [0, 0, 1, 1], [], []>} : vector<64x32xf32>, vector<32x128xf32>, vector<64x128xf32> -> vector<64x128xf32>
    %c0_121 = arith.constant 0 : index
    %c0_122 = arith.constant 0 : index
    %269 = vector.load %arg9[%c0_121, %c0_122] : memref<1x128xf32, #tpu.memory_space<vmem>>, vector<1x128xf32>
    %270 = vector.broadcast %269 : vector<1x128xf32> to vector<64x128xf32>
    %271 = arith.addf %268, %270 : vector<64x128xf32>
    %c0_123 = arith.constant 0 : index
    %c0_124 = arith.constant 0 : index
    %c0_125 = arith.constant 0 : index
    %272 = vector.load %arg10[%c0_123, %c0_124, %c0_125] : memref<1x64x128xf32, #tpu.memory_space<vmem>>, vector<1x64x128xf32>
    %273 = vector.shape_cast %272 : vector<1x64x128xf32> to vector<64x128xf32>
    %274 = vector.shape_cast %271 : vector<64x128xf32> to vector<1x64x128xf32>
    tpu.vector_store %arg10[%c0_123, %c0_124, %c0_125], %274 {strides = array<i32>} : memref<1x64x128xf32, #tpu.memory_space<vmem>>, vector<1x64x128xf32>,
    return
  }
  func.func @transform_0(%arg0: i32) -> (i32, i32, i32, i32) {
    %c0_i32 = arith.constant 0 : i32
    %c0_i32_0 = arith.constant 0 : i32
    %c0_i32_1 = arith.constant 0 : i32
    %c0_i32_2 = arith.constant 0 : i32
    return %arg0, %c0_i32, %c0_i32_0, %c0_i32_1 : i32, i32, i32, i32
  }
  func.func @transform_1(%arg0: i32) -> (i32, i32) {
    %c0_i32 = arith.constant 0 : i32
    %c0_i32_0 = arith.constant 0 : i32
    %c0_i32_1 = arith.constant 0 : i32
    return %c0_i32, %c0_i32_0 : i32, i32
  }
  func.func @transform_2(%arg0: i32) -> (i32, i32) {
    %c0_i32 = arith.constant 0 : i32
    %c0_i32_0 = arith.constant 0 : i32
    %c0_i32_1 = arith.constant 0 : i32
    return %c0_i32, %c0_i32_0 : i32, i32
  }
  func.func @transform_3(%arg0: i32) -> (i32, i32, i32) {
    %c0_i32 = arith.constant 0 : i32
    %c0_i32_0 = arith.constant 0 : i32
    %c0_i32_1 = arith.constant 0 : i32
    %c0_i32_2 = arith.constant 0 : i32
    return %c0_i32, %c0_i32_0, %c0_i32_1 : i32, i32, i32
  }
  func.func @transform_4(%arg0: i32) -> (i32, i32) {
    %c0_i32 = arith.constant 0 : i32
    %c0_i32_0 = arith.constant 0 : i32
    %c0_i32_1 = arith.constant 0 : i32
    return %c0_i32, %c0_i32_0 : i32, i32
  }
  func.func @transform_5(%arg0: i32) -> (i32, i32) {
    %c0_i32 = arith.constant 0 : i32
    %c0_i32_0 = arith.constant 0 : i32
    %c0_i32_1 = arith.constant 0 : i32
    return %c0_i32, %c0_i32_0 : i32, i32
  }
  func.func @transform_6(%arg0: i32) -> (i32, i32) {
    %c0_i32 = arith.constant 0 : i32
    %c0_i32_0 = arith.constant 0 : i32
    %c0_i32_1 = arith.constant 0 : i32
    return %c0_i32, %c0_i32_0 : i32, i32
  }
  func.func @transform_7(%arg0: i32) -> (i32, i32) {
    %c0_i32 = arith.constant 0 : i32
    %c0_i32_0 = arith.constant 0 : i32
    %c0_i32_1 = arith.constant 0 : i32
    return %c0_i32, %c0_i32_0 : i32, i32
  }
  func.func @transform_8(%arg0: i32) -> (i32, i32) {
    %c0_i32 = arith.constant 0 : i32
    %c0_i32_0 = arith.constant 0 : i32
    %c0_i32_1 = arith.constant 0 : i32
    return %c0_i32, %c0_i32_0 : i32, i32
  }
  func.func @transform_9(%arg0: i32) -> (i32, i32, i32) {
    %c0_i32 = arith.constant 0 : i32
    %c0_i32_0 = arith.constant 0 : i32
    %c0_i32_1 = arith.constant 0 : i32
    return %arg0, %c0_i32, %c0_i32_0 : i32, i32, i32
  }
}

</mosaic_0001>

<llo_original>
// kernel: dsh_forward.1
$region0: #{dsh_forward.1}
  #allocation0 [shape = 'u32[]', space=smem, size = 0x4, offset = 0x4, fixed_abs, tag = 'smem constant byte address 0x4 - core index']
  #allocation1 [shape = 'u32[144,128]{1,0:T(1,128)}', space=vmem, size = 0x12000, scoped, tag = 'internal scratch']
  #allocation2 [shape = 'f32[12,12,64]{2,1,0:T(8,128)}', space=vmem, size = 0x18000, scoped, tag = 'scratch operand']
  %s0 = inlined_call_operand.vmem [shape: f32[2,8,8,16], index: 0, kind: input, shape index: {}]
  %s1 = inlined_call_operand.vmem [shape: f32[25,64], index: 1, kind: input, shape index: {}]
  %s2 = inlined_call_operand.vmem [shape: f32[2,64], index: 2, kind: input, shape index: {}]
  %s3 = inlined_call_operand.vmem [shape: f32[2,2,64], index: 3, kind: input, shape index: {}]
  %s4 = inlined_call_operand.vmem [shape: f32[2,64], index: 4, kind: input, shape index: {}]
  %s5 = inlined_call_operand.vmem [shape: f32[32,32], index: 5, kind: input, shape index: {}]
  %s6 = inlined_call_operand.vmem [shape: f32[2,32], index: 6, kind: input, shape index: {}]
  %s7 = inlined_call_operand.vmem [shape: f32[32,128], index: 7, kind: input, shape index: {}]
  %s8 = inlined_call_operand.vmem [shape: f32[1,128], index: 8, kind: input, shape index: {}]
  %s9 = inlined_call_operand.vmem [shape: f32[2,64,128], index: 9, kind: output, shape index: {}]
  %s10 = sld [smem:[#allocation0]]
  $region69: #{dsh_forward.1} parent=0
    _
  %s12 = ssub.s32 1, %s10
  %s13 = scalar_select 0, %s12, %s10
  loop: start=0, step=1, limit=4
  $region2: #{dsh_forward.1} parent=0 // loop_pre_header
    _
  $region3: #{dsh_forward.1} parent=0 // loop_header
    %s15 = sphi 0, %s19
    %p16 = scmp.ge.s32.totalorder %s15, 4
    %s25 = sphi 0, %s27
    %s28 = sphi 0, %s25
    %s29 = sphi 0, %s28
    %s45 = sphi 0, %s29
    %s49 = sphi 0, %s49
    %s51 = sphi 0, %s49
    %s52 = sphi 0, %s51
    %s66 = sphi 0, %s52
    %s70 = sphi 0, %s70
    %s72 = sphi 0, %s70
    %s73 = sphi 0, %s72
    %s87 = sphi 0, %s73
    %s91 = sphi 0, %s91
    %s93 = sphi 0, %s91
    %s94 = sphi 0, %s93
    %s108 = sphi 0, %s94
    %s112 = sphi 0, %s112
    %s114 = sphi 0, %s112
    %s115 = sphi 0, %s114
    %s129 = sphi 0, %s115
    %s133 = sphi 0, %s133
    %s135 = sphi 0, %s133
    %s136 = sphi 0, %s135
    %s150 = sphi 0, %s136
    %s154 = sphi 0, %s154
    %s156 = sphi 0, %s154
    %s157 = sphi 0, %s156
    %s171 = sphi 0, %s157
    %s175 = sphi 0, %s175
    %s177 = sphi 0, %s175
    %s178 = sphi 0, %s177
    %s192 = sphi 0, %s178
    %s196 = sphi 0, %s196
    %s198 = sphi 0, %s196
    %s199 = sphi 0, %s198
    %s213 = sphi 0, %s199
    %s219 = sphi 0, %s221
    %s222 = sphi 0, %s219
    %s223 = sphi 0, %s222
    %s239 = sphi 0, %s223
  $region4: #{dsh_forward.1} parent=0 // loop_header_branch
    %18 = sbr.rel (%p16) target = $region8
  $region5: #{dsh_forward.1} parent=0 // loop_body
    %s20 = ssub.s32 %s15, 1
    %s21 = ssub.s32 %s15, 2
    %s22 = sadd.s32 %s15, 1
    %s23 = ssub.s32 %s15, %s22
    %p24 = scmp.eq.s32.totalorder %s23, 0
    %s26 = sadd.s32 %s25, 1
    %s27 = scalar_select %p24, %s25, %s26
    %p30 = pneg %p24
    %p31 = scmp.eq.s32.totalorder %s15, 1
    %p32 = por %p30, %p31
    %p33 = scmp.ne.s32.totalorder %s25, %s28
    %p34 = scmp.eq.s32.totalorder %s15, 0
    %p35 = por %p33, %p34
    %p36 = scmp.ne.s32.totalorder %s25, %s28
    %p37 = scmp.eq.s32.totalorder %s20, 1
    %p38 = por %p36, %p37
    %p39 = scmp.ne.s32.totalorder %s28, %s29
    %p40 = scmp.eq.s32.totalorder %s20, 0
    %p41 = por %p39, %p40
    %p42 = scmp.ne.s32.totalorder %s28, %s29
    %p43 = scmp.eq.s32.totalorder %s21, 1
    %p44 = por %p42, %p43
    %p46 = scmp.ne.s32.totalorder %s29, %s45
    %p47 = scmp.eq.s32.totalorder %s21, 0
    %p48 = por %p46, %p47
    %s50 = sadd.s32 %s49, 1
    %p53 = scmp.eq.s32.totalorder %s15, 1
    %p54 = scmp.ne.s32.totalorder %s49, %s51
    %p55 = scmp.eq.s32.totalorder %s15, 0
    %p56 = por %p54, %p55
    %p57 = scmp.ne.s32.totalorder %s49, %s51
    %p58 = scmp.eq.s32.totalorder %s20, 1
    %p59 = por %p57, %p58
    %p60 = scmp.ne.s32.totalorder %s51, %s52
    %p61 = scmp.eq.s32.totalorder %s20, 0
    %p62 = por %p60, %p61
    %p63 = scmp.ne.s32.totalorder %s51, %s52
    %p64 = scmp.eq.s32.totalorder %s21, 1
    %p65 = por %p63, %p64
    %p67 = scmp.ne.s32.totalorder %s52, %s66
    %p68 = scmp.eq.s32.totalorder %s21, 0
    %p69 = por %p67, %p68
    %s71 = sadd.s32 %s70, 1
    %p74 = scmp.eq.s32.totalorder %s15, 1
    %p75 = scmp.ne.s32.totalorder %s70, %s72
    %p76 = scmp.eq.s32.totalorder %s15, 0
    %p77 = por %p75, %p76
    %p78 = scmp.ne.s32.totalorder %s70, %s72
    %p79 = scmp.eq.s32.totalorder %s20, 1
    %p80 = por %p78, %p79
    %p81 = scmp.ne.s32.totalorder %s72, %s73
    %p82 = scmp.eq.s32.totalorder %s20, 0
    %p83 = por %p81, %p82
    %p84 = scmp.ne.s32.totalorder %s72, %s73
    %p85 = scmp.eq.s32.totalorder %s21, 1
    %p86 = por %p84, %p85
    %p88 = scmp.ne.s32.totalorder %s73, %s87
    %p89 = scmp.eq.s32.totalorder %s21, 0
    %p90 = por %p88, %p89
    %s92 = sadd.s32 %s91, 1
    %p95 = scmp.eq.s32.totalorder %s15, 1
    %p96 = scmp.ne.s32.totalorder %s91, %s93
    %p97 = scmp.eq.s32.totalorder %s15, 0
    %p98 = por %p96, %p97
    %p99 = scmp.ne.s32.totalorder %s91, %s93
    %p100 = scmp.eq.s32.totalorder %s20, 1
    %p101 = por %p99, %p100
    %p102 = scmp.ne.s32.totalorder %s93, %s94
    %p103 = scmp.eq.s32.totalorder %s20, 0
    %p104 = por %p102, %p103
    %p105 = scmp.ne.s32.totalorder %s93, %s94
    %p106 = scmp.eq.s32.totalorder %s21, 1
    %p107 = por %p105, %p106
    %p109 = scmp.ne.s32.totalorder %s94, %s108
    %p110 = scmp.eq.s32.totalorder %s21, 0
    %p111 = por %p109, %p110
    %s113 = sadd.s32 %s112, 1
    %p116 = scmp.eq.s32.totalorder %s15, 1
    %p117 = scmp.ne.s32.totalorder %s112, %s114
    %p118 = scmp.eq.s32.totalorder %s15, 0
    %p119 = por %p117, %p118
    %p120 = scmp.ne.s32.totalorder %s112, %s114
    %p121 = scmp.eq.s32.totalorder %s20, 1
    %p122 = por %p120, %p121
    %p123 = scmp.ne.s32.totalorder %s114, %s115
    %p124 = scmp.eq.s32.totalorder %s20, 0
    %p125 = por %p123, %p124
    %p126 = scmp.ne.s32.totalorder %s114, %s115
    %p127 = scmp.eq.s32.totalorder %s21, 1
    %p128 = por %p126, %p127
    %p130 = scmp.ne.s32.totalorder %s115, %s129
    %p131 = scmp.eq.s32.totalorder %s21, 0
    %p132 = por %p130, %p131
    %s134 = sadd.s32 %s133, 1
    %p137 = scmp.eq.s32.totalorder %s15, 1
    %p138 = scmp.ne.s32.totalorder %s133, %s135
    %p139 = scmp.eq.s32.totalorder %s15, 0
    %p140 = por %p138, %p139
    %p141 = scmp.ne.s32.totalorder %s133, %s135
    %p142 = scmp.eq.s32.totalorder %s20, 1
    %p143 = por %p141, %p142
    %p144 = scmp.ne.s32.totalorder %s135, %s136
    %p145 = scmp.eq.s32.totalorder %s20, 0
    %p146 = por %p144, %p145
    %p147 = scmp.ne.s32.totalorder %s135, %s136
    %p148 = scmp.eq.s32.totalorder %s21, 1
    %p149 = por %p147, %p148
    %p151 = scmp.ne.s32.totalorder %s136, %s150
    %p152 = scmp.eq.s32.totalorder %s21, 0
    %p153 = por %p151, %p152
    %s155 = sadd.s32 %s154, 1
    %p158 = scmp.eq.s32.totalorder %s15, 1
    %p159 = scmp.ne.s32.totalorder %s154, %s156
    %p160 = scmp.eq.s32.totalorder %s15, 0
    %p161 = por %p159, %p160
    %p162 = scmp.ne.s32.totalorder %s154, %s156
    %p163 = scmp.eq.s32.totalorder %s20, 1
    %p164 = por %p162, %p163
    %p165 = scmp.ne.s32.totalorder %s156, %s157
    %p166 = scmp.eq.s32.totalorder %s20, 0
    %p167 = por %p165, %p166
    %p168 = scmp.ne.s32.totalorder %s156, %s157
    %p169 = scmp.eq.s32.totalorder %s21, 1
    %p170 = por %p168, %p169
    %p172 = scmp.ne.s32.totalorder %s157, %s171
    %p173 = scmp.eq.s32.totalorder %s21, 0
    %p174 = por %p172, %p173
    %s176 = sadd.s32 %s175, 1
    %p179 = scmp.eq.s32.totalorder %s15, 1
    %p180 = scmp.ne.s32.totalorder %s175, %s177
    %p181 = scmp.eq.s32.totalorder %s15, 0
    %p182 = por %p180, %p181
    %p183 = scmp.ne.s32.totalorder %s175, %s177
    %p184 = scmp.eq.s32.totalorder %s20, 1
    %p185 = por %p183, %p184
    %p186 = scmp.ne.s32.totalorder %s177, %s178
    %p187 = scmp.eq.s32.totalorder %s20, 0
    %p188 = por %p186, %p187
    %p189 = scmp.ne.s32.totalorder %s177, %s178
    %p190 = scmp.eq.s32.totalorder %s21, 1
    %p191 = por %p189, %p190
    %p193 = scmp.ne.s32.totalorder %s178, %s192
    %p194 = scmp.eq.s32.totalorder %s21, 0
    %p195 = por %p193, %p194
    %s197 = sadd.s32 %s196, 1
    %p200 = scmp.eq.s32.totalorder %s15, 1
    %p201 = scmp.ne.s32.totalorder %s196, %s198
    %p202 = scmp.eq.s32.totalorder %s15, 0
    %p203 = por %p201, %p202
    %p204 = scmp.ne.s32.totalorder %s196, %s198
    %p205 = scmp.eq.s32.totalorder %s20, 1
    %p206 = por %p204, %p205
    %p207 = scmp.ne.s32.totalorder %s198, %s199
    %p208 = scmp.eq.s32.totalorder %s20, 0
    %p209 = por %p207, %p208
    %p210 = scmp.ne.s32.totalorder %s198, %s199
    %p211 = scmp.eq.s32.totalorder %s21, 1
    %p212 = por %p210, %p211
    %p214 = scmp.ne.s32.totalorder %s199, %s213
    %p215 = scmp.eq.s32.totalorder %s21, 0
    %p216 = por %p214, %p215
    %s217 = ssub.s32 %s15, %s22
    %p218 = scmp.eq.s32.totalorder %s217, 0
    %s220 = sadd.s32 %s219, 1
    %s221 = scalar_select %p218, %s219, %s220
    %p224 = pneg %p218
    %p225 = scmp.eq.s32.totalorder %s15, 1
    %p226 = por %p224, %p225
    %p227 = scmp.ne.s32.totalorder %s219, %s222
    %p228 = scmp.eq.s32.totalorder %s15, 0
    %p229 = por %p227, %p228
    %p230 = scmp.ne.s32.totalorder %s219, %s222
    %p231 = scmp.eq.s32.totalorder %s20, 1
    %p232 = por %p230, %p231
    %p233 = scmp.ne.s32.totalorder %s222, %s223
    %p234 = scmp.eq.s32.totalorder %s20, 0
    %p235 = por %p233, %p234
    %p236 = scmp.ne.s32.totalorder %s222, %s223
    %p237 = scmp.eq.s32.totalorder %s21, 1
    %p238 = por %p236, %p237
    %p240 = scmp.ne.s32.totalorder %s223, %s239
    %p241 = scmp.eq.s32.totalorder %s21, 0
    %p242 = por %p240, %p241
    %p243 = scmp.le.s32.totalorder 1, %s15
    %p244 = scmp.lt.s32.totalorder %s15, 3
    %p245 = pnand %p243, %p244
    %p246 = pneg %p245
    // Predicated region
    $region9: #{dsh_forward.1} parent=5 // pred_check
      _
    $region10: #{dsh_forward.1} parent=5 // pred_check_branch
      %248 = sbr.rel (%p245) target = $region12
    $region11: #{dsh_forward.1} parent=5 // pred_region
      %s249 = ssub.s32 %s15, 1
      // Predicated region
      $region13: #{dsh_forward.1} parent=11 // pred_check
        %p250 = pneg %p62
      $region14: #{dsh_forward.1} parent=11 // pred_check_branch
        %252 = sbr.rel (%p250) target = $region16
      $region15: #{dsh_forward.1} parent=11 // pred_region
        _
      $region16: #{dsh_forward.1} parent=11 // pred_fallthru
        _
      // Predicated region
      $region17: #{dsh_forward.1} parent=11 // pred_check
        %p253 = pneg %p83
      $region18: #{dsh_forward.1} parent=11 // pred_check_branch
        %255 = sbr.rel (%p253) target = $region20
      $region19: #{dsh_forward.1} parent=11 // pred_region
        _
      $region20: #{dsh_forward.1} parent=11 // pred_fallthru
        _
      // Predicated region
      $region21: #{dsh_forward.1} parent=11 // pred_check
        %p256 = pneg %p104
      $region22: #{dsh_forward.1} parent=11 // pred_check_branch
        %258 = sbr.rel (%p256) target = $region24
      $region23: #{dsh_forward.1} parent=11 // pred_region
        _
      $region24: #{dsh_forward.1} parent=11 // pred_fallthru
        _
      // Predicated region
      $region25: #{dsh_forward.1} parent=11 // pred_check
        %p259 = pneg %p125
      $region26: #{dsh_forward.1} parent=11 // pred_check_branch
        %261 = sbr.rel (%p259) target = $region28
      $region27: #{dsh_forward.1} parent=11 // pred_region
        _
      $region28: #{dsh_forward.1} parent=11 // pred_fallthru
        _
      // Predicated region
      $region29: #{dsh_forward.1} parent=11 // pred_check
        %p262 = pneg %p146
      $region30: #{dsh_forward.1} parent=11 // pred_check_branch
        %264 = sbr.rel (%p262) target = $region32
      $region31: #{dsh_forward.1} parent=11 // pred_region
        _
      $region32: #{dsh_forward.1} parent=11 // pred_fallthru
        _
      // Predicated region
      $region33: #{dsh_forward.1} parent=11 // pred_check
        %p265 = pneg %p167
      $region34: #{dsh_forward.1} parent=11 // pred_check_branch
        %267 = sbr.rel (%p265) target = $region36
      $region35: #{dsh_forward.1} parent=11 // pred_region
        _
      $region36: #{dsh_forward.1} parent=11 // pred_fallthru
        _
      // Predicated region
      $region37: #{dsh_forward.1} parent=11 // pred_check
        %p268 = pneg %p188
      $region38: #{dsh_forward.1} parent=11 // pred_check_branch
        %270 = sbr.rel (%p268) target = $region40
      $region39: #{dsh_forward.1} parent=11 // pred_region
        _
      $region40: #{dsh_forward.1} parent=11 // pred_fallthru
        _
      // Predicated region
      $region41: #{dsh_forward.1} parent=11 // pred_check
        %p271 = pneg %p209
      $region42: #{dsh_forward.1} parent=11 // pred_check_branch
        %273 = sbr.rel (%p271) target = $region44
      $region43: #{dsh_forward.1} parent=11 // pred_region
        _
      $region44: #{dsh_forward.1} parent=11 // pred_fallthru
        _
    $region12: #{dsh_forward.1} parent=5 // pred_fallthru
      _
    %p274 = scmp.lt.s32.totalorder %s15, 2
    // Predicated region
    $region45: #{dsh_forward.1} parent=5 // pred_check
      %p275 = pneg %p274
    $region46: #{dsh_forward.1} parent=5 // pred_check_branch
      %277 = sbr.rel (%p275) target = $region48
    $region47: #{dsh_forward.1} parent=5 // pred_region
      // Predicated region
      $region49: #{dsh_forward.1} parent=47 // pred_check
        %p278 = pneg %p35
      $region50: #{dsh_forward.1} parent=47 // pred_check_branch
        %280 = sbr.rel (%p278) target = $region52
      $region51: #{dsh_forward.1} parent=47 // pred_region
        %p281 = scmp.lt.s32.totalorder %s15, 1
        %s282 = scalar_select %p281, %s15, 1
        %s283 = smul.addr %s282, 8
        %s284 = smul.addr %s283, 8
        %s285 = scalar_lea.vmem %s0, %s284
      $region52: #{dsh_forward.1} parent=47 // pred_fallthru
        _
    $region48: #{dsh_forward.1} parent=5 // pred_fallthru
      _
    %p286 = scmp.le.s32.totalorder 1, %s15
    %p287 = scmp.lt.s32.totalorder %s15, 3
    %p288 = pnand %p286, %p287
    %p289 = pneg %p288
    // Predicated region
    $region53: #{dsh_forward.1} parent=5 // pred_check
      _
    $region54: #{dsh_forward.1} parent=5 // pred_check_branch
      %291 = sbr.rel (%p288) target = $region56
    $region55: #{dsh_forward.1} parent=5 // pred_region
      %s292 = ssub.s32 %s15, 1
      %p293 = scmp.lt.s32.totalorder %s20, 1
      %s294 = scalar_select %p293, %s20, 1
      %s295 = smul.addr %s294, 8
      %s296 = smul.addr %s295, 8
      %s297 = scalar_lea.vmem %s0, %s296
      %p298 = pneg %p41
      %p299 = pneg %p38
      %p300 = pneg %p62
      %p301 = pneg %p59
      %p302 = pneg %p83
      %p303 = pneg %p80
      %p304 = pneg %p104
      %p305 = pneg %p101
      %p306 = pneg %p125
      %p307 = pneg %p122
      %p308 = pneg %p146
      %p309 = pneg %p143
      %p310 = pneg %p167
      %p311 = pneg %p164
      %p312 = pneg %p188
      %p313 = pneg %p185
      %p314 = pneg %p209
      %p315 = pneg %p206
      %p316 = pneg %p235
      %p317 = pneg %p232
      %p318 = scmp.lt.s32.totalorder %s20, 1
      %s319 = scalar_select %p318, %s20, 1
      %s320 = smul.addr %s319, 8
      %s321 = smul.addr %s320, 8
      %s322 = scalar_lea.vmem %s9, %s321
      %p323 = scmp.lt.s32.totalorder %s20, 1
      %s324 = scalar_select %p323, %s20, 1
      %s325 = smul.addr %s324, 8
      %s326 = smul.addr %s325, 8
      %s327 = scalar_lea.vmem %s0, %s326
      %p328 = scmp.lt.s32.totalorder %s20, 1
      %s329 = scalar_select %p328, %s20, 1
      %s330 = smul.addr %s329, 8
      %s331 = smul.addr %s330, 8
      %s332 = scalar_lea.vmem %s9, %s331
      %vm333 = vcmask 523264
      %334 = vst.msk [vmem:[#allocation2] sm:$0xff] %vm333, 0.0
      %vm335 = vcmask 519168
      %336 = vst.msk [vmem:[#allocation2 + $0x8] sm:$0xf] %vm335, 0.0
      %337 = vst.msk [vmem:[#allocation2 + $0x10] sm:$0xff] %vm333, 0.0
      %338 = vst.msk [vmem:[#allocation2 + $0x18] sm:$0xf] %vm335, 0.0
      %s339 = scalar_lea.vmem [#allocation2], 160
      %340 = vst.msk [vmem:[%s339] sm:$0xff] %vm333, 0.0
      %341 = vst.msk [vmem:[%s339 + $0x8] sm:$0xf] %vm335, 0.0
      %342 = vst.msk [vmem:[%s339 + $0x10] sm:$0xff] %vm333, 0.0
      %343 = vst.msk [vmem:[%s339 + $0x18] sm:$0xf] %vm335, 0.0
      %s344 = scalar_lea.vmem [#allocation2], 32
      %vm345 = vcmask 517120
      %346 = vst.msk [vmem:[%s344] sm:$0x3] %vm345, 0.0
      %347 = vst.msk [vmem:[%s344 + $0x10] sm:$0x3] %vm345, 0.0
      %348 = vst.msk [vmem:[%s344 + $0x20] sm:$0x3] %vm345, 0.0
      %349 = vst.msk [vmem:[%s344 + $0x30] sm:$0x3] %vm345, 0.0
      %350 = vst.msk [vmem:[%s344 + $0x40] sm:$0x3] %vm345, 0.0
      %351 = vst.msk [vmem:[%s344 + $0x50] sm:$0x3] %vm345, 0.0
      %352 = vst.msk [vmem:[%s344 + $0x60] sm:$0x3] %vm345, 0.0
      %353 = vst.msk [vmem:[%s344 + $0x70] sm:$0x3] %vm345, 0.0
      %354 = vst.msk [vmem:[%s344 + $0xa] sm:$0x3] %vm345, 0.0
      %355 = vst.msk [vmem:[%s344 + $0x1a] sm:$0x3] %vm345, 0.0
      %356 = vst.msk [vmem:[%s344 + $0x2a] sm:$0x3] %vm345, 0.0
      %357 = vst.msk [vmem:[%s344 + $0x3a] sm:$0x3] %vm345, 0.0
      %358 = vst.msk [vmem:[%s344 + $0x4a] sm:$0x3] %vm345, 0.0
      %359 = vst.msk [vmem:[%s344 + $0x5a] sm:$0x3] %vm345, 0.0
      %360 = vst.msk [vmem:[%s344 + $0x6a] sm:$0x3] %vm345, 0.0
      %361 = vst.msk [vmem:[%s344 + $0x7a] sm:$0x3] %vm345, 0.0
      %v362 = vld [vmem:[%s327] sm:$0xff]
      %v363 = vld [vmem:[%s327 + $0x8] sm:$0xff]
      %v364 = vld [vmem:[%s327 + $0x10] sm:$0xff]
      %v365 = vld [vmem:[%s327 + $0x18] sm:$0xff]
      %v366 = vld [vmem:[%s327 + $0x20] sm:$0xff]
      %v367 = vld [vmem:[%s327 + $0x28] sm:$0xff]
      %v368 = vld [vmem:[%s327 + $0x30] sm:$0xff]
      %v369 = vld [vmem:[%s327 + $0x38] sm:$0xff]
      %378 = vrot.lane.b32.xlu0 %v362, 16
      %v379 = vpop.permute.xlu0 %378
      %380 = vrot.lane.b32.xlu0 %v363, 16
      %v381 = vpop.permute.xlu0 %380
      %382 = vrot.lane.b32.xlu0 %v364, 16
      %v383 = vpop.permute.xlu0 %382
      %384 = vrot.lane.b32.xlu0 %v365, 16
      %v385 = vpop.permute.xlu0 %384
      %386 = vrot.lane.b32.xlu0 %v366, 16
      %v387 = vpop.permute.xlu0 %386
      %388 = vrot.lane.b32.xlu0 %v367, 16
      %v389 = vpop.permute.xlu0 %388
      %390 = vrot.lane.b32.xlu0 %v368, 16
      %v391 = vpop.permute.xlu0 %390
      %392 = vrot.lane.b32.xlu0 %v369, 16
      %v393 = vpop.permute.xlu0 %392
      %402 = vrot.lane.b32.xlu0 %v362, 32
      %v403 = vpop.permute.xlu0 %402
      %404 = vrot.lane.b32.xlu0 %v363, 32
      %v405 = vpop.permute.xlu0 %404
      %406 = vrot.lane.b32.xlu0 %v364, 32
      %v407 = vpop.permute.xlu0 %406
      %408 = vrot.lane.b32.xlu0 %v365, 32
      %v409 = vpop.permute.xlu0 %408
      %410 = vrot.lane.b32.xlu0 %v366, 32
      %v411 = vpop.permute.xlu0 %410
      %412 = vrot.lane.b32.xlu0 %v367, 32
      %v413 = vpop.permute.xlu0 %412
      %414 = vrot.lane.b32.xlu0 %v368, 32
      %v415 = vpop.permute.xlu0 %414
      %416 = vrot.lane.b32.xlu0 %v369, 32
      %v417 = vpop.permute.xlu0 %416
      %426 = vrot.lane.b32.xlu0 %v362, 48
      %v427 = vpop.permute.xlu0 %426
      %428 = vrot.lane.b32.xlu0 %v363, 48
      %v429 = vpop.permute.xlu0 %428
      %430 = vrot.lane.b32.xlu0 %v364, 48
      %v431 = vpop.permute.xlu0 %430
      %432 = vrot.lane.b32.xlu0 %v365, 48
      %v433 = vpop.permute.xlu0 %432
      %434 = vrot.lane.b32.xlu0 %v366, 48
      %v435 = vpop.permute.xlu0 %434
      %436 = vrot.lane.b32.xlu0 %v367, 48
      %v437 = vpop.permute.xlu0 %436
      %438 = vrot.lane.b32.xlu0 %v368, 48
      %v439 = vpop.permute.xlu0 %438
      %440 = vrot.lane.b32.xlu0 %v369, 48
      %v441 = vpop.permute.xlu0 %440
      %vm450 = vcmask 130048
      %v451 = vsel %vm450, %v362, %v379
      %v452 = vsel %vm450, %v363, %v381
      %v453 = vsel %vm450, %v364, %v383
      %v454 = vsel %vm450, %v365, %v385
      %v455 = vsel %vm450, %v366, %v387
      %v456 = vsel %vm450, %v367, %v389
      %v457 = vsel %vm450, %v368, %v391
      %v458 = vsel %vm450, %v369, %v393
      %vm459 = vcmask 261120
      %v460 = vsel %vm459, %v451, %v403
      %v461 = vsel %vm459, %v452, %v405
      %v462 = vsel %vm459, %v453, %v407
      %v463 = vsel %vm459, %v454, %v409
      %v464 = vsel %vm459, %v455, %v411
      %v465 = vsel %vm459, %v456, %v413
      %v466 = vsel %vm459, %v457, %v415
      %v467 = vsel %vm459, %v458, %v417
      %vm468 = vcmask 392192
      %v469 = vsel %vm468, %v460, %v427
      %v470 = vsel %vm468, %v461, %v429
      %v471 = vsel %vm468, %v462, %v431
      %v472 = vsel %vm468, %v463, %v433
      %v473 = vsel %vm468, %v464, %v435
      %v474 = vsel %vm468, %v465, %v437
      %v475 = vsel %vm468, %v466, %v439
      %v476 = vsel %vm468, %v467, %v441
      %477 = vst.msk [vmem:[%s344 + $0x2] sm:$0xff] %vm333, %v469
      %478 = vst.msk [vmem:[%s344 + $0x12] sm:$0xff] %vm333, %v470
      %479 = vst.msk [vmem:[%s344 + $0x22] sm:$0xff] %vm333, %v471
      %480 = vst.msk [vmem:[%s344 + $0x32] sm:$0xff] %vm333, %v472
      %481 = vst.msk [vmem:[%s344 + $0x42] sm:$0xff] %vm333, %v473
      %482 = vst.msk [vmem:[%s344 + $0x52] sm:$0xff] %vm333, %v474
      %483 = vst.msk [vmem:[%s344 + $0x62] sm:$0xff] %vm333, %v475
      %484 = vst.msk [vmem:[%s344 + $0x72] sm:$0xff] %vm333, %v476
      %v485 = vld [vmem:[%s1] sm:$0xff]
      %v486 = vld [vmem:[%s1 + $0x8] sm:$0xff]
      %v487 = vld [vmem:[%s1 + $0x10] sm:$0xff]
      %v488 = vld [vmem:[%s1 + $0x18] sm:$0x1]
      %v489 = vld [vmem:[#allocation2] sm:$0xff]
      %v490 = vld [vmem:[#allocation2 + $0x10] sm:$0xff]
      %v491 = vld [vmem:[#allocation2 + $0x20] sm:$0xff]
      %v492 = vld [vmem:[#allocation2 + $0x30] sm:$0xff]
      %v493 = vld [vmem:[#allocation2 + $0x40] sm:$0xff]
      %v494 = vld [vmem:[#allocation2 + $0x50] sm:$0xff]
      %v495 = vld [vmem:[#allocation2 + $0x60] sm:$0xff]
      %v496 = vld [vmem:[#allocation2 + $0x70] sm:$0xff]
      %v497 = vlaneseq
      %v498 = vshrl.u32 %v497, 7
      %v499 = vsub.s32 0, %v498
      %v500 = vrot.slane %v485, %v499
      %v501 = vmul.f32 %v489, %v500
      %v502 = vmul.f32 %v490, %v500
      %v503 = vmul.f32 %v491, %v500
      %v504 = vmul.f32 %v492, %v500
      %v505 = vmul.f32 %v493, %v500
      %v506 = vmul.f32 %v494, %v500
      %v507 = vmul.f32 %v495, %v500
      %v508 = vmul.f32 %v496, %v500
      %v509 = vadd.f32 %v501, 0.0
      %v510 = vadd.f32 %v502, 0.0
      %v511 = vadd.f32 %v503, 0.0
      %v512 = vadd.f32 %v504, 0.0
      %v513 = vadd.f32 %v505, 0.0
      %v514 = vadd.f32 %v506, 0.0
      %v515 = vadd.f32 %v507, 0.0
      %v516 = vadd.f32 %v508, 0.0
      %v517 = vld [vmem:[#allocation2 + $0x1] sm:$0xff]
      %v518 = vld [vmem:[#allocation2 + $0x11] sm:$0xff]
      %v519 = vld [vmem:[#allocation2 + $0x21] sm:$0xff]
      %v520 = vld [vmem:[#allocation2 + $0x31] sm:$0xff]
      %v521 = vld [vmem:[#allocation2 + $0x41] sm:$0xff]
      %v522 = vld [vmem:[#allocation2 + $0x51] sm:$0xff]
      %v523 = vld [vmem:[#allocation2 + $0x61] sm:$0xff]
      %v524 = vld [vmem:[#allocation2 + $0x71] sm:$0xff]
      %v525 = vlaneseq
      %v526 = vshrl.u32 %v525, 7
      %v527 = vsub.s32 1, %v526
      %v528 = vrot.slane %v485, %v527
      %v529 = vmul.f32 %v517, %v528
      %v530 = vmul.f32 %v518, %v528
      %v531 = vmul.f32 %v519, %v528
      %v532 = vmul.f32 %v520, %v528
      %v533 = vmul.f32 %v521, %v528
      %v534 = vmul.f32 %v522, %v528
      %v535 = vmul.f32 %v523, %v528
      %v536 = vmul.f32 %v524, %v528
      %v537 = vadd.f32 %v509, %v529
      %v538 = vadd.f32 %v510, %v530
      %v539 = vadd.f32 %v511, %v531
      %v540 = vadd.f32 %v512, %v532
      %v541 = vadd.f32 %v513, %v533
      %v542 = vadd.f32 %v514, %v534
      %v543 = vadd.f32 %v515, %v535
      %v544 = vadd.f32 %v516, %v536
      %v545 = vld [vmem:[#allocation2 + $0x2] sm:$0xff]
      %v546 = vld [vmem:[#allocation2 + $0x12] sm:$0xff]
      %v547 = vld [vmem:[#allocation2 + $0x22] sm:$0xff]
      %v548 = vld [vmem:[#allocation2 + $0x32] sm:$0xff]
      %v549 = vld [vmem:[#allocation2 + $0x42] sm:$0xff]
      %v550 = vld [vmem:[#allocation2 + $0x52] sm:$0xff]
      %v551 = vld [vmem:[#allocation2 + $0x62] sm:$0xff]
      %v552 = vld [vmem:[#allocation2 + $0x72] sm:$0xff]
      %v553 = vlaneseq
      %v554 = vshrl.u32 %v553, 7
      %v555 = vsub.s32 2, %v554
      %v556 = vrot.slane %v485, %v555
      %v557 = vmul.f32 %v545, %v556
      %v558 = vmul.f32 %v546, %v556
      %v559 = vmul.f32 %v547, %v556
      %v560 = vmul.f32 %v548, %v556
      %v561 = vmul.f32 %v549, %v556
      %v562 = vmul.f32 %v550, %v556
      %v563 = vmul.f32 %v551, %v556
      %v564 = vmul.f32 %v552, %v556
      %v565 = vadd.f32 %v537, %v557
      %v566 = vadd.f32 %v538, %v558
      %v567 = vadd.f32 %v539, %v559
      %v568 = vadd.f32 %v540, %v560
      %v569 = vadd.f32 %v541, %v561
      %v570 = vadd.f32 %v542, %v562
      %v571 = vadd.f32 %v543, %v563
      %v572 = vadd.f32 %v544, %v564
      %v573 = vld [vmem:[#allocation2 + $0x3] sm:$0xff]
      %v574 = vld [vmem:[#allocation2 + $0x13] sm:$0xff]
      %v575 = vld [vmem:[#allocation2 + $0x23] sm:$0xff]
      %v576 = vld [vmem:[#allocation2 + $0x33] sm:$0xff]
      %v577 = vld [vmem:[#allocation2 + $0x43] sm:$0xff]
      %v578 = vld [vmem:[#allocation2 + $0x53] sm:$0xff]
      %v579 = vld [vmem:[#allocation2 + $0x63] sm:$0xff]
      %v580 = vld [vmem:[#allocation2 + $0x73] sm:$0xff]
      %v581 = vlaneseq
      %v582 = vshrl.u32 %v581, 7
      %v583 = vsub.s32 3, %v582
      %v584 = vrot.slane %v485, %v583
      %v585 = vmul.f32 %v573, %v584
      %v586 = vmul.f32 %v574, %v584
      %v587 = vmul.f32 %v575, %v584
      %v588 = vmul.f32 %v576, %v584
      %v589 = vmul.f32 %v577, %v584
      %v590 = vmul.f32 %v578, %v584
      %v591 = vmul.f32 %v579, %v584
      %v592 = vmul.f32 %v580, %v584
      %v593 = vadd.f32 %v565, %v585
      %v594 = vadd.f32 %v566, %v586
      %v595 = vadd.f32 %v567, %v587
      %v596 = vadd.f32 %v568, %v588
      %v597 = vadd.f32 %v569, %v589
      %v598 = vadd.f32 %v570, %v590
      %v599 = vadd.f32 %v571, %v591
      %v600 = vadd.f32 %v572, %v592
      %v601 = vld [vmem:[#allocation2 + $0x4] sm:$0xff]
      %v602 = vld [vmem:[#allocation2 + $0x14] sm:$0xff]
      %v603 = vld [vmem:[#allocation2 + $0x24] sm:$0xff]
      %v604 = vld [vmem:[#allocation2 + $0x34] sm:$0xff]
      %v605 = vld [vmem:[#allocation2 + $0x44] sm:$0xff]
      %v606 = vld [vmem:[#allocation2 + $0x54] sm:$0xff]
      %v607 = vld [vmem:[#allocation2 + $0x64] sm:$0xff]
      %v608 = vld [vmem:[#allocation2 + $0x74] sm:$0xff]
      %v609 = vlaneseq
      %v610 = vshrl.u32 %v609, 7
      %v611 = vsub.s32 4, %v610
      %v612 = vrot.slane %v485, %v611
      %v613 = vmul.f32 %v601, %v612
      %v614 = vmul.f32 %v602, %v612
      %v615 = vmul.f32 %v603, %v612
      %v616 = vmul.f32 %v604, %v612
      %v617 = vmul.f32 %v605, %v612
      %v618 = vmul.f32 %v606, %v612
      %v619 = vmul.f32 %v607, %v612
      %v620 = vmul.f32 %v608, %v612
      %v621 = vadd.f32 %v593, %v613
      %v622 = vadd.f32 %v594, %v614
      %v623 = vadd.f32 %v595, %v615
      %v624 = vadd.f32 %v596, %v616
      %v625 = vadd.f32 %v597, %v617
      %v626 = vadd.f32 %v598, %v618
      %v627 = vadd.f32 %v599, %v619
      %v628 = vadd.f32 %v600, %v620
      %s629 = scalar_lea.vmem [#allocation2], 16
      %v630 = vld [vmem:[%s629] sm:$0xff]
      %v631 = vld [vmem:[%s629 + $0x10] sm:$0xff]
      %v632 = vld [vmem:[%s629 + $0x20] sm:$0xff]
      %v633 = vld [vmem:[%s629 + $0x30] sm:$0xff]
      %v634 = vld [vmem:[%s629 + $0x40] sm:$0xff]
      %v635 = vld [vmem:[%s629 + $0x50] sm:$0xff]
      %v636 = vld [vmem:[%s629 + $0x60] sm:$0xff]
      %v637 = vld [vmem:[%s629 + $0x70] sm:$0xff]
      %v638 = vlaneseq
      %v639 = vshrl.u32 %v638, 7
      %v640 = vsub.s32 5, %v639
      %v641 = vrot.slane %v485, %v640
      %v642 = vmul.f32 %v630, %v641
      %v643 = vmul.f32 %v631, %v641
      %v644 = vmul.f32 %v632, %v641
      %v645 = vmul.f32 %v633, %v641
      %v646 = vmul.f32 %v634, %v641
      %v647 = vmul.f32 %v635, %v641
      %v648 = vmul.f32 %v636, %v641
      %v649 = vmul.f32 %v637, %v641
      %v650 = vadd.f32 %v621, %v642
      %v651 = vadd.f32 %v622, %v643
      %v652 = vadd.f32 %v623, %v644
      %v653 = vadd.f32 %v624, %v645
      %v654 = vadd.f32 %v625, %v646
      %v655 = vadd.f32 %v626, %v647
      %v656 = vadd.f32 %v627, %v648
      %v657 = vadd.f32 %v628, %v649
      %v658 = vld [vmem:[%s629 + $0x1] sm:$0xff]
      %v659 = vld [vmem:[%s629 + $0x11] sm:$0xff]
      %v660 = vld [vmem:[%s629 + $0x21] sm:$0xff]
      %v661 = vld [vmem:[%s629 + $0x31] sm:$0xff]
      %v662 = vld [vmem:[%s629 + $0x41] sm:$0xff]
      %v663 = vld [vmem:[%s629 + $0x51] sm:$0xff]
      %v664 = vld [vmem:[%s629 + $0x61] sm:$0xff]
      %v665 = vld [vmem:[%s629 + $0x71] sm:$0xff]
      %v666 = vlaneseq
      %v667 = vshrl.u32 %v666, 7
      %v668 = vsub.s32 6, %v667
      %v669 = vrot.slane %v485, %v668
      %v670 = vmul.f32 %v658, %v669
      %v671 = vmul.f32 %v659, %v669
      %v672 = vmul.f32 %v660, %v669
      %v673 = vmul.f32 %v661, %v669
      %v674 = vmul.f32 %v662, %v669
      %v675 = vmul.f32 %v663, %v669
      %v676 = vmul.f32 %v664, %v669
      %v677 = vmul.f32 %v665, %v669
      %v678 = vadd.f32 %v650, %v670
      %v679 = vadd.f32 %v651, %v671
      %v680 = vadd.f32 %v652, %v672
      %v681 = vadd.f32 %v653, %v673
      %v682 = vadd.f32 %v654, %v674
      %v683 = vadd.f32 %v655, %v675
      %v684 = vadd.f32 %v656, %v676
      %v685 = vadd.f32 %v657, %v677
      %v686 = vld [vmem:[%s629 + $0x2] sm:$0xff]
      %v687 = vld [vmem:[%s629 + $0x12] sm:$0xff]
      %v688 = vld [vmem:[%s629 + $0x22] sm:$0xff]
      %v689 = vld [vmem:[%s629 + $0x32] sm:$0xff]
      %v690 = vld [vmem:[%s629 + $0x42] sm:$0xff]
      %v691 = vld [vmem:[%s629 + $0x52] sm:$0xff]
      %v692 = vld [vmem:[%s629 + $0x62] sm:$0xff]
      %v693 = vld [vmem:[%s629 + $0x72] sm:$0xff]
      %v694 = vlaneseq
      %v695 = vshrl.u32 %v694, 7
      %v696 = vsub.s32 7, %v695
      %v697 = vrot.slane %v485, %v696
      %v698 = vmul.f32 %v686, %v697
      %v699 = vmul.f32 %v687, %v697
      %v700 = vmul.f32 %v688, %v697
      %v701 = vmul.f32 %v689, %v697
      %v702 = vmul.f32 %v690, %v697
      %v703 = vmul.f32 %v691, %v697
      %v704 = vmul.f32 %v692, %v697
      %v705 = vmul.f32 %v693, %v697
      %v706 = vadd.f32 %v678, %v698
      %v707 = vadd.f32 %v679, %v699
      %v708 = vadd.f32 %v680, %v700
      %v709 = vadd.f32 %v681, %v701
      %v710 = vadd.f32 %v682, %v702
      %v711 = vadd.f32 %v683, %v703
      %v712 = vadd.f32 %v684, %v704
      %v713 = vadd.f32 %v685, %v705
      %v714 = vld [vmem:[%s629 + $0x3] sm:$0xff]
      %v715 = vld [vmem:[%s629 + $0x13] sm:$0xff]
      %v716 = vld [vmem:[%s629 + $0x23] sm:$0xff]
      %v717 = vld [vmem:[%s629 + $0x33] sm:$0xff]
      %v718 = vld [vmem:[%s629 + $0x43] sm:$0xff]
      %v719 = vld [vmem:[%s629 + $0x53] sm:$0xff]
      %v720 = vld [vmem:[%s629 + $0x63] sm:$0xff]
      %v721 = vld [vmem:[%s629 + $0x73] sm:$0xff]
      %v722 = vlaneseq
      %v723 = vshrl.u32 %v722, 7
      %v724 = vsub.s32 0, %v723
      %v725 = vrot.slane %v486, %v724
      %v726 = vmul.f32 %v714, %v725
      %v727 = vmul.f32 %v715, %v725
      %v728 = vmul.f32 %v716, %v725
      %v729 = vmul.f32 %v717, %v725
      %v730 = vmul.f32 %v718, %v725
      %v731 = vmul.f32 %v719, %v725
      %v732 = vmul.f32 %v720, %v725
      %v733 = vmul.f32 %v721, %v725
      %v734 = vadd.f32 %v706, %v726
      %v735 = vadd.f32 %v707, %v727
      %v736 = vadd.f32 %v708, %v728
      %v737 = vadd.f32 %v709, %v729
      %v738 = vadd.f32 %v710, %v730
      %v739 = vadd.f32 %v711, %v731
      %v740 = vadd.f32 %v712, %v732
      %v741 = vadd.f32 %v713, %v733
      %v742 = vld [vmem:[%s629 + $0x4] sm:$0xff]
      %v743 = vld [vmem:[%s629 + $0x14] sm:$0xff]
      %v744 = vld [vmem:[%s629 + $0x24] sm:$0xff]
      %v745 = vld [vmem:[%s629 + $0x34] sm:$0xff]
      %v746 = vld [vmem:[%s629 + $0x44] sm:$0xff]
      %v747 = vld [vmem:[%s629 + $0x54] sm:$0xff]
      %v748 = vld [vmem:[%s629 + $0x64] sm:$0xff]
      %v749 = vld [vmem:[%s629 + $0x74] sm:$0xff]
      %v750 = vlaneseq
      %v751 = vshrl.u32 %v750, 7
      %v752 = vsub.s32 1, %v751
      %v753 = vrot.slane %v486, %v752
      %v754 = vmul.f32 %v742, %v753
      %v755 = vmul.f32 %v743, %v753
      %v756 = vmul.f32 %v744, %v753
      %v757 = vmul.f32 %v745, %v753
      %v758 = vmul.f32 %v746, %v753
      %v759 = vmul.f32 %v747, %v753
      %v760 = vmul.f32 %v748, %v753
      %v761 = vmul.f32 %v749, %v753
      %v762 = vadd.f32 %v734, %v754
      %v763 = vadd.f32 %v735, %v755
      %v764 = vadd.f32 %v736, %v756
      %v765 = vadd.f32 %v737, %v757
      %v766 = vadd.f32 %v738, %v758
      %v767 = vadd.f32 %v739, %v759
      %v768 = vadd.f32 %v740, %v760
      %v769 = vadd.f32 %v741, %v761
      %v770 = vld [vmem:[%s344] sm:$0xff]
      %v771 = vld [vmem:[%s344 + $0x10] sm:$0xff]
      %v772 = vld [vmem:[%s344 + $0x20] sm:$0xff]
      %v773 = vld [vmem:[%s344 + $0x30] sm:$0xff]
      %v774 = vld [vmem:[%s344 + $0x40] sm:$0xff]
      %v775 = vld [vmem:[%s344 + $0x50] sm:$0xff]
      %v776 = vld [vmem:[%s344 + $0x60] sm:$0xff]
      %v777 = vld [vmem:[%s344 + $0x70] sm:$0xff]
      %v778 = vlaneseq
      %v779 = vshrl.u32 %v778, 7
      %v780 = vsub.s32 2, %v779
      %v781 = vrot.slane %v486, %v780
      %v782 = vmul.f32 %v770, %v781
      %v783 = vmul.f32 %v771, %v781
      %v784 = vmul.f32 %v772, %v781
      %v785 = vmul.f32 %v773, %v781
      %v786 = vmul.f32 %v774, %v781
      %v787 = vmul.f32 %v775, %v781
      %v788 = vmul.f32 %v776, %v781
      %v789 = vmul.f32 %v777, %v781
      %v790 = vadd.f32 %v762, %v782
      %v791 = vadd.f32 %v763, %v783
      %v792 = vadd.f32 %v764, %v784
      %v793 = vadd.f32 %v765, %v785
      %v794 = vadd.f32 %v766, %v786
      %v795 = vadd.f32 %v767, %v787
      %v796 = vadd.f32 %v768, %v788
      %v797 = vadd.f32 %v769, %v789
      %v798 = vld [vmem:[%s344 + $0x1] sm:$0xff]
      %v799 = vld [vmem:[%s344 + $0x11] sm:$0xff]
      %v800 = vld [vmem:[%s344 + $0x21] sm:$0xff]
      %v801 = vld [vmem:[%s344 + $0x31] sm:$0xff]
      %v802 = vld [vmem:[%s344 + $0x41] sm:$0xff]
      %v803 = vld [vmem:[%s344 + $0x51] sm:$0xff]
      %v804 = vld [vmem:[%s344 + $0x61] sm:$0xff]
      %v805 = vld [vmem:[%s344 + $0x71] sm:$0xff]
      %v806 = vlaneseq
      %v807 = vshrl.u32 %v806, 7
      %v808 = vsub.s32 3, %v807
      %v809 = vrot.slane %v486, %v808
      %v810 = vmul.f32 %v798, %v809
      %v811 = vmul.f32 %v799, %v809
      %v812 = vmul.f32 %v800, %v809
      %v813 = vmul.f32 %v801, %v809
      %v814 = vmul.f32 %v802, %v809
      %v815 = vmul.f32 %v803, %v809
      %v816 = vmul.f32 %v804, %v809
      %v817 = vmul.f32 %v805, %v809
      %v818 = vadd.f32 %v790, %v810
      %v819 = vadd.f32 %v791, %v811
      %v820 = vadd.f32 %v792, %v812
      %v821 = vadd.f32 %v793, %v813
      %v822 = vadd.f32 %v794, %v814
      %v823 = vadd.f32 %v795, %v815
      %v824 = vadd.f32 %v796, %v816
      %v825 = vadd.f32 %v797, %v817
      %v826 = vld [vmem:[%s344 + $0x2] sm:$0xff]
      %v827 = vld [vmem:[%s344 + $0x12] sm:$0xff]
      %v828 = vld [vmem:[%s344 + $0x22] sm:$0xff]
      %v829 = vld [vmem:[%s344 + $0x32] sm:$0xff]
      %v830 = vld [vmem:[%s344 + $0x42] sm:$0xff]
      %v831 = vld [vmem:[%s344 + $0x52] sm:$0xff]
      %v832 = vld [vmem:[%s344 + $0x62] sm:$0xff]
      %v833 = vld [vmem:[%s344 + $0x72] sm:$0xff]
      %v834 = vlaneseq
      %v835 = vshrl.u32 %v834, 7
      %v836 = vsub.s32 4, %v835
      %v837 = vrot.slane %v486, %v836
      %v838 = vmul.f32 %v826, %v837
      %v839 = vmul.f32 %v827, %v837
      %v840 = vmul.f32 %v828, %v837
      %v841 = vmul.f32 %v829, %v837
      %v842 = vmul.f32 %v830, %v837
      %v843 = vmul.f32 %v831, %v837
      %v844 = vmul.f32 %v832, %v837
      %v845 = vmul.f32 %v833, %v837
      %v846 = vadd.f32 %v818, %v838
      %v847 = vadd.f32 %v819, %v839
      %v848 = vadd.f32 %v820, %v840
      %v849 = vadd.f32 %v821, %v841
      %v850 = vadd.f32 %v822, %v842
      %v851 = vadd.f32 %v823, %v843
      %v852 = vadd.f32 %v824, %v844
      %v853 = vadd.f32 %v825, %v845
      %v854 = vld [vmem:[%s344 + $0x3] sm:$0xff]
      %v855 = vld [vmem:[%s344 + $0x13] sm:$0xff]
      %v856 = vld [vmem:[%s344 + $0x23] sm:$0xff]
      %v857 = vld [vmem:[%s344 + $0x33] sm:$0xff]
      %v858 = vld [vmem:[%s344 + $0x43] sm:$0xff]
      %v859 = vld [vmem:[%s344 + $0x53] sm:$0xff]
      %v860 = vld [vmem:[%s344 + $0x63] sm:$0xff]
      %v861 = vld [vmem:[%s344 + $0x73] sm:$0xff]
      %v862 = vlaneseq
      %v863 = vshrl.u32 %v862, 7
      %v864 = vsub.s32 5, %v863
      %v865 = vrot.slane %v486, %v864
      %v866 = vmul.f32 %v854, %v865
      %v867 = vmul.f32 %v855, %v865
      %v868 = vmul.f32 %v856, %v865
      %v869 = vmul.f32 %v857, %v865
      %v870 = vmul.f32 %v858, %v865
      %v871 = vmul.f32 %v859, %v865
      %v872 = vmul.f32 %v860, %v865
      %v873 = vmul.f32 %v861, %v865
      %v874 = vadd.f32 %v846, %v866
      %v875 = vadd.f32 %v847, %v867
      %v876 = vadd.f32 %v848, %v868
      %v877 = vadd.f32 %v849, %v869
      %v878 = vadd.f32 %v850, %v870
      %v879 = vadd.f32 %v851, %v871
      %v880 = vadd.f32 %v852, %v872
      %v881 = vadd.f32 %v853, %v873
      %v882 = vld [vmem:[%s344 + $0x4] sm:$0xff]
      %v883 = vld [vmem:[%s344 + $0x14] sm:$0xff]
      %v884 = vld [vmem:[%s344 + $0x24] sm:$0xff]
      %v885 = vld [vmem:[%s344 + $0x34] sm:$0xff]
      %v886 = vld [vmem:[%s344 + $0x44] sm:$0xff]
      %v887 = vld [vmem:[%s344 + $0x54] sm:$0xff]
      %v888 = vld [vmem:[%s344 + $0x64] sm:$0xff]
      %v889 = vld [vmem:[%s344 + $0x74] sm:$0xff]
      %v890 = vlaneseq
      %v891 = vshrl.u32 %v890, 7
      %v892 = vsub.s32 6, %v891
      %v893 = vrot.slane %v486, %v892
      %v894 = vmul.f32 %v882, %v893
      %v895 = vmul.f32 %v883, %v893
      %v896 = vmul.f32 %v884, %v893
      %v897 = vmul.f32 %v885, %v893
      %v898 = vmul.f32 %v886, %v893
      %v899 = vmul.f32 %v887, %v893
      %v900 = vmul.f32 %v888, %v893
      %v901 = vmul.f32 %v889, %v893
      %v902 = vadd.f32 %v874, %v894
      %v903 = vadd.f32 %v875, %v895
      %v904 = vadd.f32 %v876, %v896
      %v905 = vadd.f32 %v877, %v897
      %v906 = vadd.f32 %v878, %v898
      %v907 = vadd.f32 %v879, %v899
      %v908 = vadd.f32 %v880, %v900
      %v909 = vadd.f32 %v881, %v901
      %s910 = scalar_lea.vmem [#allocation2], 48
      %v911 = vld [vmem:[%s910] sm:$0xff]
      %v912 = vld [vmem:[%s910 + $0x10] sm:$0xff]
      %v913 = vld [vmem:[%s910 + $0x20] sm:$0xff]
      %v914 = vld [vmem:[%s910 + $0x30] sm:$0xff]
      %v915 = vld [vmem:[%s910 + $0x40] sm:$0xff]
      %v916 = vld [vmem:[%s910 + $0x50] sm:$0xff]
      %v917 = vld [vmem:[%s910 + $0x60] sm:$0xff]
      %v918 = vld [vmem:[%s910 + $0x70] sm:$0xff]
      %v919 = vlaneseq
      %v920 = vshrl.u32 %v919, 7
      %v921 = vsub.s32 7, %v920
      %v922 = vrot.slane %v486, %v921
      %v923 = vmul.f32 %v911, %v922
      %v924 = vmul.f32 %v912, %v922
      %v925 = vmul.f32 %v913, %v922
      %v926 = vmul.f32 %v914, %v922
      %v927 = vmul.f32 %v915, %v922
      %v928 = vmul.f32 %v916, %v922
      %v929 = vmul.f32 %v917, %v922
      %v930 = vmul.f32 %v918, %v922
      %v931 = vadd.f32 %v902, %v923
      %v932 = vadd.f32 %v903, %v924
      %v933 = vadd.f32 %v904, %v925
      %v934 = vadd.f32 %v905, %v926
      %v935 = vadd.f32 %v906, %v927
      %v936 = vadd.f32 %v907, %v928
      %v937 = vadd.f32 %v908, %v929
      %v938 = vadd.f32 %v909, %v930
      %v939 = vld [vmem:[%s910 + $0x1] sm:$0xff]
      %v940 = vld [vmem:[%s910 + $0x11] sm:$0xff]
      %v941 = vld [vmem:[%s910 + $0x21] sm:$0xff]
      %v942 = vld [vmem:[%s910 + $0x31] sm:$0xff]
      %v943 = vld [vmem:[%s910 + $0x41] sm:$0xff]
      %v944 = vld [vmem:[%s910 + $0x51] sm:$0xff]
      %v945 = vld [vmem:[%s910 + $0x61] sm:$0xff]
      %v946 = vld [vmem:[%s910 + $0x71] sm:$0xff]
      %v947 = vlaneseq
      %v948 = vshrl.u32 %v947, 7
      %v949 = vsub.s32 0, %v948
      %v950 = vrot.slane %v487, %v949
      %v951 = vmul.f32 %v939, %v950
      %v952 = vmul.f32 %v940, %v950
      %v953 = vmul.f32 %v941, %v950
      %v954 = vmul.f32 %v942, %v950
      %v955 = vmul.f32 %v943, %v950
      %v956 = vmul.f32 %v944, %v950
      %v957 = vmul.f32 %v945, %v950
      %v958 = vmul.f32 %v946, %v950
      %v959 = vadd.f32 %v931, %v951
      %v960 = vadd.f32 %v932, %v952
      %v961 = vadd.f32 %v933, %v953
      %v962 = vadd.f32 %v934, %v954
      %v963 = vadd.f32 %v935, %v955
      %v964 = vadd.f32 %v936, %v956
      %v965 = vadd.f32 %v937, %v957
      %v966 = vadd.f32 %v938, %v958
      %v967 = vld [vmem:[%s910 + $0x2] sm:$0xff]
      %v968 = vld [vmem:[%s910 + $0x12] sm:$0xff]
      %v969 = vld [vmem:[%s910 + $0x22] sm:$0xff]
      %v970 = vld [vmem:[%s910 + $0x32] sm:$0xff]
      %v971 = vld [vmem:[%s910 + $0x42] sm:$0xff]
      %v972 = vld [vmem:[%s910 + $0x52] sm:$0xff]
      %v973 = vld [vmem:[%s910 + $0x62] sm:$0xff]
      %v974 = vld [vmem:[%s910 + $0x72] sm:$0xff]
      %v975 = vlaneseq
      %v976 = vshrl.u32 %v975, 7
      %v977 = vsub.s32 1, %v976
      %v978 = vrot.slane %v487, %v977
      %v979 = vmul.f32 %v967, %v978
      %v980 = vmul.f32 %v968, %v978
      %v981 = vmul.f32 %v969, %v978
      %v982 = vmul.f32 %v970, %v978
      %v983 = vmul.f32 %v971, %v978
      %v984 = vmul.f32 %v972, %v978
      %v985 = vmul.f32 %v973, %v978
      %v986 = vmul.f32 %v974, %v978
      %v987 = vadd.f32 %v959, %v979
      %v988 = vadd.f32 %v960, %v980
      %v989 = vadd.f32 %v961, %v981
      %v990 = vadd.f32 %v962, %v982
      %v991 = vadd.f32 %v963, %v983
      %v992 = vadd.f32 %v964, %v984
      %v993 = vadd.f32 %v965, %v985
      %v994 = vadd.f32 %v966, %v986
      %v995 = vld [vmem:[%s910 + $0x3] sm:$0xff]
      %v996 = vld [vmem:[%s910 + $0x13] sm:$0xff]
      %v997 = vld [vmem:[%s910 + $0x23] sm:$0xff]
      %v998 = vld [vmem:[%s910 + $0x33] sm:$0xff]
      %v999 = vld [vmem:[%s910 + $0x43] sm:$0xff]
      %v1000 = vld [vmem:[%s910 + $0x53] sm:$0xff]
      %v1001 = vld [vmem:[%s910 + $0x63] sm:$0xff]
      %v1002 = vld [vmem:[%s910 + $0x73] sm:$0xff]
      %v1003 = vlaneseq
      %v1004 = vshrl.u32 %v1003, 7
      %v1005 = vsub.s32 2, %v1004
      %v1006 = vrot.slane %v487, %v1005
      %v1007 = vmul.f32 %v995, %v1006
      %v1008 = vmul.f32 %v996, %v1006
      %v1009 = vmul.f32 %v997, %v1006
      %v1010 = vmul.f32 %v998, %v1006
      %v1011 = vmul.f32 %v999, %v1006
      %v1012 = vmul.f32 %v1000, %v1006
      %v1013 = vmul.f32 %v1001, %v1006
      %v1014 = vmul.f32 %v1002, %v1006
      %v1015 = vadd.f32 %v987, %v1007
      %v1016 = vadd.f32 %v988, %v1008
      %v1017 = vadd.f32 %v989, %v1009
      %v1018 = vadd.f32 %v990, %v1010
      %v1019 = vadd.f32 %v991, %v1011
      %v1020 = vadd.f32 %v992, %v1012
      %v1021 = vadd.f32 %v993, %v1013
      %v1022 = vadd.f32 %v994, %v1014
      %v1023 = vld [vmem:[%s910 + $0x4] sm:$0xff]
      %v1024 = vld [vmem:[%s910 + $0x14] sm:$0xff]
      %v1025 = vld [vmem:[%s910 + $0x24] sm:$0xff]
      %v1026 = vld [vmem:[%s910 + $0x34] sm:$0xff]
      %v1027 = vld [vmem:[%s910 + $0x44] sm:$0xff]
      %v1028 = vld [vmem:[%s910 + $0x54] sm:$0xff]
      %v1029 = vld [vmem:[%s910 + $0x64] sm:$0xff]
      %v1030 = vld [vmem:[%s910 + $0x74] sm:$0xff]
      %v1031 = vlaneseq
      %v1032 = vshrl.u32 %v1031, 7
      %v1033 = vsub.s32 3, %v1032
      %v1034 = vrot.slane %v487, %v1033
      %v1035 = vmul.f32 %v1023, %v1034
      %v1036 = vmul.f32 %v1024, %v1034
      %v1037 = vmul.f32 %v1025, %v1034
      %v1038 = vmul.f32 %v1026, %v1034
      %v1039 = vmul.f32 %v1027, %v1034
      %v1040 = vmul.f32 %v1028, %v1034
      %v1041 = vmul.f32 %v1029, %v1034
      %v1042 = vmul.f32 %v1030, %v1034
      %v1043 = vadd.f32 %v1015, %v1035
      %v1044 = vadd.f32 %v1016, %v1036
      %v1045 = vadd.f32 %v1017, %v1037
      %v1046 = vadd.f32 %v1018, %v1038
      %v1047 = vadd.f32 %v1019, %v1039
      %v1048 = vadd.f32 %v1020, %v1040
      %v1049 = vadd.f32 %v1021, %v1041
      %v1050 = vadd.f32 %v1022, %v1042
      %s1051 = scalar_lea.vmem [#allocation2], 64
      %v1052 = vld [vmem:[%s1051] sm:$0xff]
      %v1053 = vld [vmem:[%s1051 + $0x10] sm:$0xff]
      %v1054 = vld [vmem:[%s1051 + $0x20] sm:$0xff]
      %v1055 = vld [vmem:[%s1051 + $0x30] sm:$0xff]
      %v1056 = vld [vmem:[%s1051 + $0x40] sm:$0xff]
      %v1057 = vld [vmem:[%s1051 + $0x50] sm:$0xff]
      %v1058 = vld [vmem:[%s1051 + $0x60] sm:$0xff]
      %v1059 = vld [vmem:[%s1051 + $0x70] sm:$0xff]
      %v1060 = vlaneseq
      %v1061 = vshrl.u32 %v1060, 7
      %v1062 = vsub.s32 4, %v1061
      %v1063 = vrot.slane %v487, %v1062
      %v1064 = vmul.f32 %v1052, %v1063
      %v1065 = vmul.f32 %v1053, %v1063
      %v1066 = vmul.f32 %v1054, %v1063
      %v1067 = vmul.f32 %v1055, %v1063
      %v1068 = vmul.f32 %v1056, %v1063
      %v1069 = vmul.f32 %v1057, %v1063
      %v1070 = vmul.f32 %v1058, %v1063
      %v1071 = vmul.f32 %v1059, %v1063
      %v1072 = vadd.f32 %v1043, %v1064
      %v1073 = vadd.f32 %v1044, %v1065
      %v1074 = vadd.f32 %v1045, %v1066
      %v1075 = vadd.f32 %v1046, %v1067
      %v1076 = vadd.f32 %v1047, %v1068
      %v1077 = vadd.f32 %v1048, %v1069
      %v1078 = vadd.f32 %v1049, %v1070
      %v1079 = vadd.f32 %v1050, %v1071
      %v1080 = vld [vmem:[%s1051 + $0x1] sm:$0xff]
      %v1081 = vld [vmem:[%s1051 + $0x11] sm:$0xff]
      %v1082 = vld [vmem:[%s1051 + $0x21] sm:$0xff]
      %v1083 = vld [vmem:[%s1051 + $0x31] sm:$0xff]
      %v1084 = vld [vmem:[%s1051 + $0x41] sm:$0xff]
      %v1085 = vld [vmem:[%s1051 + $0x51] sm:$0xff]
      %v1086 = vld [vmem:[%s1051 + $0x61] sm:$0xff]
      %v1087 = vld [vmem:[%s1051 + $0x71] sm:$0xff]
      %v1088 = vlaneseq
      %v1089 = vshrl.u32 %v1088, 7
      %v1090 = vsub.s32 5, %v1089
      %v1091 = vrot.slane %v487, %v1090
      %v1092 = vmul.f32 %v1080, %v1091
      %v1093 = vmul.f32 %v1081, %v1091
      %v1094 = vmul.f32 %v1082, %v1091
      %v1095 = vmul.f32 %v1083, %v1091
      %v1096 = vmul.f32 %v1084, %v1091
      %v1097 = vmul.f32 %v1085, %v1091
      %v1098 = vmul.f32 %v1086, %v1091
      %v1099 = vmul.f32 %v1087, %v1091
      %v1100 = vadd.f32 %v1072, %v1092
      %v1101 = vadd.f32 %v1073, %v1093
      %v1102 = vadd.f32 %v1074, %v1094
      %v1103 = vadd.f32 %v1075, %v1095
      %v1104 = vadd.f32 %v1076, %v1096
      %v1105 = vadd.f32 %v1077, %v1097
      %v1106 = vadd.f32 %v1078, %v1098
      %v1107 = vadd.f32 %v1079, %v1099
      %v1108 = vld [vmem:[%s1051 + $0x2] sm:$0xff]
      %v1109 = vld [vmem:[%s1051 + $0x12] sm:$0xff]
      %v1110 = vld [vmem:[%s1051 + $0x22] sm:$0xff]
      %v1111 = vld [vmem:[%s1051 + $0x32] sm:$0xff]
      %v1112 = vld [vmem:[%s1051 + $0x42] sm:$0xff]
      %v1113 = vld [vmem:[%s1051 + $0x52] sm:$0xff]
      %v1114 = vld [vmem:[%s1051 + $0x62] sm:$0xff]
      %v1115 = vld [vmem:[%s1051 + $0x72] sm:$0xff]
      %v1116 = vlaneseq
      %v1117 = vshrl.u32 %v1116, 7
      %v1118 = vsub.s32 6, %v1117
      %v1119 = vrot.slane %v487, %v1118
      %v1120 = vmul.f32 %v1108, %v1119
      %v1121 = vmul.f32 %v1109, %v1119
      %v1122 = vmul.f32 %v1110, %v1119
      %v1123 = vmul.f32 %v1111, %v1119
      %v1124 = vmul.f32 %v1112, %v1119
      %v1125 = vmul.f32 %v1113, %v1119
      %v1126 = vmul.f32 %v1114, %v1119
      %v1127 = vmul.f32 %v1115, %v1119
      %v1128 = vadd.f32 %v1100, %v1120
      %v1129 = vadd.f32 %v1101, %v1121
      %v1130 = vadd.f32 %v1102, %v1122
      %v1131 = vadd.f32 %v1103, %v1123
      %v1132 = vadd.f32 %v1104, %v1124
      %v1133 = vadd.f32 %v1105, %v1125
      %v1134 = vadd.f32 %v1106, %v1126
      %v1135 = vadd.f32 %v1107, %v1127
      %v1136 = vld [vmem:[%s1051 + $0x3] sm:$0xff]
      %v1137 = vld [vmem:[%s1051 + $0x13] sm:$0xff]
      %v1138 = vld [vmem:[%s1051 + $0x23] sm:$0xff]
      %v1139 = vld [vmem:[%s1051 + $0x33] sm:$0xff]
      %v1140 = vld [vmem:[%s1051 + $0x43] sm:$0xff]
      %v1141 = vld [vmem:[%s1051 + $0x53] sm:$0xff]
      %v1142 = vld [vmem:[%s1051 + $0x63] sm:$0xff]
      %v1143 = vld [vmem:[%s1051 + $0x73] sm:$0xff]
      %v1144 = vlaneseq
      %v1145 = vshrl.u32 %v1144, 7
      %v1146 = vsub.s32 7, %v1145
      %v1147 = vrot.slane %v487, %v1146
      %v1148 = vmul.f32 %v1136, %v1147
      %v1149 = vmul.f32 %v1137, %v1147
      %v1150 = vmul.f32 %v1138, %v1147
      %v1151 = vmul.f32 %v1139, %v1147
      %v1152 = vmul.f32 %v1140, %v1147
      %v1153 = vmul.f32 %v1141, %v1147
      %v1154 = vmul.f32 %v1142, %v1147
      %v1155 = vmul.f32 %v1143, %v1147
      %v1156 = vadd.f32 %v1128, %v1148
      %v1157 = vadd.f32 %v1129, %v1149
      %v1158 = vadd.f32 %v1130, %v1150
      %v1159 = vadd.f32 %v1131, %v1151
      %v1160 = vadd.f32 %v1132, %v1152
      %v1161 = vadd.f32 %v1133, %v1153
      %v1162 = vadd.f32 %v1134, %v1154
      %v1163 = vadd.f32 %v1135, %v1155
      %v1164 = vld [vmem:[%s1051 + $0x4] sm:$0xff]
      %v1165 = vld [vmem:[%s1051 + $0x14] sm:$0xff]
      %v1166 = vld [vmem:[%s1051 + $0x24] sm:$0xff]
      %v1167 = vld [vmem:[%s1051 + $0x34] sm:$0xff]
      %v1168 = vld [vmem:[%s1051 + $0x44] sm:$0xff]
      %v1169 = vld [vmem:[%s1051 + $0x54] sm:$0xff]
      %v1170 = vld [vmem:[%s1051 + $0x64] sm:$0xff]
      %v1171 = vld [vmem:[%s1051 + $0x74] sm:$0xff]
      %v1172 = vlaneseq
      %v1173 = vshrl.u32 %v1172, 7
      %v1174 = vsub.s32 0, %v1173
      %v1175 = vrot.slane %v488, %v1174
      %v1176 = vmul.f32 %v1164, %v1175
      %v1177 = vmul.f32 %v1165, %v1175
      %v1178 = vmul.f32 %v1166, %v1175
      %v1179 = vmul.f32 %v1167, %v1175
      %v1180 = vmul.f32 %v1168, %v1175
      %v1181 = vmul.f32 %v1169, %v1175
      %v1182 = vmul.f32 %v1170, %v1175
      %v1183 = vmul.f32 %v1171, %v1175
      %v1184 = vadd.f32 %v1156, %v1176
      %v1185 = vadd.f32 %v1157, %v1177
      %v1186 = vadd.f32 %v1158, %v1178
      %v1187 = vadd.f32 %v1159, %v1179
      %v1188 = vadd.f32 %v1160, %v1180
      %v1189 = vadd.f32 %v1161, %v1181
      %v1190 = vadd.f32 %v1162, %v1182
      %v1191 = vadd.f32 %v1163, %v1183
      %v1192 = vld [vmem:[%s2] sm:$0x1]
      %v1193 = vlaneseq
      %v1194 = vshrl.u32 %v1193, 7
      %v1195 = vsub.s32 0, %v1194
      %v1196 = vrot.slane %v1192, %v1195
      %v1197 = vmul.f32 %v1184, %v1196
      %v1198 = vmul.f32 %v1185, %v1196
      %v1199 = vmul.f32 %v1186, %v1196
      %v1200 = vmul.f32 %v1187, %v1196
      %v1201 = vmul.f32 %v1188, %v1196
      %v1202 = vmul.f32 %v1189, %v1196
      %v1203 = vmul.f32 %v1190, %v1196
      %v1204 = vmul.f32 %v1191, %v1196
      %v1205 = vld [vmem:[%s2 + $0x1] sm:$0x1]
      %v1206 = vlaneseq
      %v1207 = vshrl.u32 %v1206, 7
      %v1208 = vsub.s32 0, %v1207
      %v1209 = vrot.slane %v1205, %v1208
      %v1210 = vadd.f32 %v1197, %v1209
      %v1211 = vadd.f32 %v1198, %v1209
      %v1212 = vadd.f32 %v1199, %v1209
      %v1213 = vadd.f32 %v1200, %v1209
      %v1214 = vadd.f32 %v1201, %v1209
      %v1215 = vadd.f32 %v1202, %v1209
      %v1216 = vadd.f32 %v1203, %v1209
      %v1217 = vadd.f32 %v1204, %v1209
      %v1218 = vmax.f32 %v1210, 0.0
      %v1219 = vmax.f32 %v1211, 0.0
      %v1220 = vmax.f32 %v1212, 0.0
      %v1221 = vmax.f32 %v1213, 0.0
      %v1222 = vmax.f32 %v1214, 0.0
      %v1223 = vmax.f32 %v1215, 0.0
      %v1224 = vmax.f32 %v1216, 0.0
      %v1225 = vmax.f32 %v1217, 0.0
      %v1226 = vsel %vm333, %v1218, 0.0
      %v1227 = vsel %vm333, %v1219, 0.0
      %v1228 = vadd.f32 %v1226, %v1227
      %v1229 = vsel %vm333, %v1220, 0.0
      %v1230 = vadd.f32 %v1228, %v1229
      %v1231 = vsel %vm333, %v1221, 0.0
      %v1232 = vadd.f32 %v1230, %v1231
      %v1233 = vsel %vm333, %v1222, 0.0
      %v1234 = vadd.f32 %v1232, %v1233
      %v1235 = vsel %vm333, %v1223, 0.0
      %v1236 = vadd.f32 %v1234, %v1235
      %v1237 = vsel %vm333, %v1224, 0.0
      %v1238 = vadd.f32 %v1236, %v1237
      %v1239 = vsel %vm333, %v1225, 0.0
      %v1240 = vadd.f32 %v1238, %v1239
      %v1241 = vrot.slane %v1240, 4
      %v1242 = vadd.f32 %v1240, %v1241
      %v1243 = vrot.slane %v1242, 2
      %v1244 = vadd.f32 %v1242, %v1243
      %v1245 = vrot.slane %v1244, 1
      %v1246 = vadd.f32 %v1244, %v1245
      %v1247 = vrcp.pop 64.0
      %v1248 = vmul.f32 %v1246, %v1247
      %v1249 = vld [vmem:[%s3] sm:$0x3]
      %v1250 = vld [vmem:[%s3 + $0x2] sm:$0x3]
      %v1251 = vld [vmem:[%s4] sm:$0x3]
      %v1252 = vmul.f32 %v1248, %v1249
      %vm1253 = vcmask 516096
      %v1254 = vsel %vm1253, %v1252, 0.0
      %1255 = vadd.xlane.f32.xlu0 %v1254
      %v1256 = vpop.xlane.xlu0 %1255
      %vm1257 = vcmask 517121
      %v1258 = vsel %vm1257, %v1252, 0.0
      %1259 = vadd.xlane.f32.xlu0 %v1258
      %v1260 = vpop.xlane.xlu0 %1259
      %v1262 = vrot.slane %v1260, 1
      %vm1264 = vcmask 7168
      %v1265 = vsel %vm1264, %v1256, %v1262
      %v1266 = vadd.f32 %v1265, %v1251
      %v1267 = vmax.f32 %v1266, 0.0
      %1269 = vset.pattern.permute.xlu0 0
      %1270 = vperm.xlu0 %1269, %v1267
      %v1271 = vpop.permute.xlu0 %1270
      %v1273 = vmul.f32 %v1271, %v1250
      %v1275 = vrot.slane %v1273, 7
      %v1277 = vadd.f32 %v1251, %v1275
      %1278 = vset.pattern.permute.xlu0 1
      %1279 = vperm.xlu0 %1278, %v1267
      %v1280 = vpop.permute.xlu0 %1279
      %v1283 = vrot.slane %v1250, 1
      %v1285 = vmul.f32 %v1280, %v1283
      %v1287 = vrot.slane %v1285, 7
      %v1289 = vadd.f32 %v1277, %v1287
      %v1290 = vmax.f32 %v1289, 0.0
      %v1291 = vlaneseq
      %v1292 = vshrl.u32 %v1291, 7
      %v1293 = vsub.s32 1, %v1292
      %v1294 = vrot.slane %v1290, %v1293
      %v1295 = vmul.f32 %v1218, %v1294
      %v1296 = vmul.f32 %v1219, %v1294
      %v1297 = vmul.f32 %v1220, %v1294
      %v1298 = vmul.f32 %v1221, %v1294
      %v1299 = vmul.f32 %v1222, %v1294
      %v1300 = vmul.f32 %v1223, %v1294
      %v1301 = vmul.f32 %v1224, %v1294
      %v1302 = vmul.f32 %v1225, %v1294
      %1311 = vrot.lane.b32.xlu0 %v1295, 96
      %v1312 = vpop.permute.xlu0 %1311
      %1313 = vrot.lane.b32.xlu0 %v1296, 96
      %v1314 = vpop.permute.xlu0 %1313
      %1315 = vrot.lane.b32.xlu0 %v1297, 96
      %v1316 = vpop.permute.xlu0 %1315
      %1317 = vrot.lane.b32.xlu0 %v1298, 96
      %v1318 = vpop.permute.xlu0 %1317
      %1319 = vrot.lane.b32.xlu0 %v1299, 96
      %v1320 = vpop.permute.xlu0 %1319
      %1321 = vrot.lane.b32.xlu0 %v1300, 96
      %v1322 = vpop.permute.xlu0 %1321
      %1323 = vrot.lane.b32.xlu0 %v1301, 96
      %v1324 = vpop.permute.xlu0 %1323
      %1325 = vrot.lane.b32.xlu0 %v1302, 96
      %v1326 = vpop.permute.xlu0 %1325
      %v1335 = vadd.f32 %v1295, %v1312
      %v1336 = vadd.f32 %v1296, %v1314
      %v1337 = vadd.f32 %v1297, %v1316
      %v1338 = vadd.f32 %v1298, %v1318
      %v1339 = vadd.f32 %v1299, %v1320
      %v1340 = vadd.f32 %v1300, %v1322
      %v1341 = vadd.f32 %v1301, %v1324
      %v1342 = vadd.f32 %v1302, %v1326
      %v1343 = vld [vmem:[%s5] sm:$0xff]
      %v1344 = vld [vmem:[%s5 + $0x8] sm:$0xff]
      %v1345 = vld [vmem:[%s5 + $0x10] sm:$0xff]
      %v1346 = vld [vmem:[%s5 + $0x18] sm:$0xff]
      %v1348 = vsel %vm459, %v1335, 0
      %v1351 = vsel %vm459, %v1336, 0
      %v1354 = vsel %vm459, %v1337, 0
      %v1357 = vsel %vm459, %v1338, 0
      %v1360 = vsel %vm459, %v1339, 0
      %v1363 = vsel %vm459, %v1340, 0
      %v1366 = vsel %vm459, %v1341, 0
      %v1369 = vsel %vm459, %v1342, 0
      %1371 = vmatprep.subr.mxu0 0.0
      %1372 = vmatpush1.msra.mxu0 %v1343
      %1373 = vmatprep.subr.mxu0 0.0
      %1374 = vmatpush1.msra.mxu0 %v1344
      %1375 = vmatprep.subr.mxu0 0.0
      %1376 = vmatpush1.msra.mxu0 %v1345
      %1377 = vmatprep.subr.mxu0 0.0
      %1378 = vmatpush1.msra.mxu0 %v1346
      %1379 = vmatprep.subr.mxu0 0.0
      %1380 = vmatpush1.msra.mxu0 0.0
      %1381 = vmatprep.subr.mxu0 0.0
      %1382 = vmatpush1.msra.mxu0 0.0
      %1383 = vmatprep.subr.mxu0 0.0
      %1384 = vmatpush1.msra.mxu0 0.0
      %1385 = vmatprep.subr.mxu0 0.0
      %1386 = vmatpush1.msra.mxu0 0.0
      %1387 = vmatprep.subr.mxu0 0.0
      %1388 = vmatpush1.msra.mxu0 0.0
      %1389 = vmatprep.subr.mxu0 0.0
      %1390 = vmatpush1.msra.mxu0 0.0
      %1391 = vmatprep.subr.mxu0 0.0
      %1392 = vmatpush1.msra.mxu0 0.0
      %1393 = vmatprep.subr.mxu0 0.0
      %1394 = vmatpush1.msra.mxu0 0.0
      %1395 = vmatprep.subr.mxu0 0.0
      %1396 = vmatpush1.msra.mxu0 0.0
      %1397 = vmatprep.subr.mxu0 0.0
      %1398 = vmatpush1.msra.mxu0 0.0
      %1399 = vmatprep.subr.mxu0 0.0
      %1400 = vmatpush1.msra.mxu0 0.0
      %1401 = vmatprep.subr.mxu0 0.0
      %1402 = vmatpush1.msra.mxu0 0.0
      %1403 = vmatprep.subr.mxu0 0.0
      %1404 = vmatpush1.msra.mxu0 0.0
      %1405 = vmatprep.subr.mxu0 0.0
      %1406 = vmatpush1.msra.mxu0 0.0
      %1407 = vmatprep.subr.mxu0 0.0
      %1408 = vmatpush1.msra.mxu0 0.0
      %1409 = vmatprep.subr.mxu0 0.0
      %1410 = vmatpush1.msra.mxu0 0.0
      %1411 = vmatprep.subr.mxu0 0.0
      %1412 = vmatpush1.msra.mxu0 0.0
      %1413 = vmatprep.subr.mxu0 0.0
      %1414 = vmatpush1.msra.mxu0 0.0
      %1415 = vmatprep.subr.mxu0 0.0
      %1416 = vmatpush1.msra.mxu0 0.0
      %1417 = vmatprep.subr.mxu0 0.0
      %1418 = vmatpush1.msra.mxu0 0.0
      %1419 = vmatprep.subr.mxu0 0.0
      %1420 = vmatpush1.msra.mxu0 0.0
      %1421 = vmatprep.subr.mxu0 0.0
      %1422 = vmatpush1.msra.mxu0 0.0
      %1423 = vmatprep.subr.mxu0 0.0
      %1424 = vmatpush1.msra.mxu0 0.0
      %1425 = vmatprep.subr.mxu0 0.0
      %1426 = vmatpush1.msra.mxu0 0.0
      %1427 = vmatprep.subr.mxu0 0.0
      %1428 = vmatpush1.msra.mxu0 0.0
      %1429 = vmatprep.subr.mxu0 0.0
      %1430 = vmatpush1.msra.mxu0 0.0
      %1431 = vmatprep.subr.mxu0 0.0
      %1432 = vmatpush1.msra.mxu0 0.0
      %1433 = vmatprep.subr.mxu0 0.0
      %1434 = vmatpush1.msra.mxu0 0.0
      %1435 = vmatprep.mubr.f32.mxu0 0.0
      %1436 = vmatmul.mubr.f32.gmra.mrb[0].mxu0 %v1348
      %v1437 = vpop.f32.mrb[0].mxu0
      %v1438 = vadd.f32 0.0, %v1437
      %v1439 = vpop.f32.mrb[0].mxu0
      %1440 = vmatprep.mubr.f32.mxu0 0.0
      %1441 = vmatmul.mubr.f32.gmra.mrb[0].mxu0 %v1351
      %v1442 = vpop.f32.mrb[0].mxu0
      %v1443 = vadd.f32 0.0, %v1442
      %v1444 = vpop.f32.mrb[0].mxu0
      %1445 = vmatprep.mubr.f32.mxu0 0.0
      %1446 = vmatmul.mubr.f32.gmra.mrb[0].mxu0 %v1354
      %v1447 = vpop.f32.mrb[0].mxu0
      %v1448 = vadd.f32 0.0, %v1447
      %v1449 = vpop.f32.mrb[0].mxu0
      %1450 = vmatprep.mubr.f32.mxu0 0.0
      %1451 = vmatmul.mubr.f32.gmra.mrb[0].mxu0 %v1357
      %v1452 = vpop.f32.mrb[0].mxu0
      %v1453 = vadd.f32 0.0, %v1452
      %v1454 = vpop.f32.mrb[0].mxu0
      %1455 = vmatprep.mubr.f32.mxu0 0.0
      %1456 = vmatmul.mubr.f32.gmra.mrb[0].mxu0 %v1360
      %v1457 = vpop.f32.mrb[0].mxu0
      %v1458 = vadd.f32 0.0, %v1457
      %v1459 = vpop.f32.mrb[0].mxu0
      %1460 = vmatprep.mubr.f32.mxu0 0.0
      %1461 = vmatmul.mubr.f32.gmra.mrb[0].mxu0 %v1363
      %v1462 = vpop.f32.mrb[0].mxu0
      %v1463 = vadd.f32 0.0, %v1462
      %v1464 = vpop.f32.mrb[0].mxu0
      %1465 = vmatprep.mubr.f32.mxu0 0.0
      %1466 = vmatmul.mubr.f32.gmra.mrb[0].mxu0 %v1366
      %v1467 = vpop.f32.mrb[0].mxu0
      %v1468 = vadd.f32 0.0, %v1467
      %v1469 = vpop.f32.mrb[0].mxu0
      %1470 = vmatprep.mubr.f32.mxu0 0.0
      %1471 = vmatmul.mubr.f32.gmra.mrb[0].mxu0 %v1369
      %v1472 = vpop.f32.mrb[0].mxu0
      %v1473 = vadd.f32 0.0, %v1472
      %v1474 = vpop.f32.mrb[0].mxu0
      %1475 = vdwg.mxu0
      %v1476 = vld [vmem:[%s6] sm:$0x1]
      %v1477 = vlaneseq
      %v1478 = vshrl.u32 %v1477, 7
      %v1479 = vsub.s32 0, %v1478
      %v1480 = vrot.slane %v1476, %v1479
      %v1481 = vmul.f32 %v1438, %v1480
      %v1482 = vmul.f32 %v1443, %v1480
      %v1483 = vmul.f32 %v1448, %v1480
      %v1484 = vmul.f32 %v1453, %v1480
      %v1485 = vmul.f32 %v1458, %v1480
      %v1486 = vmul.f32 %v1463, %v1480
      %v1487 = vmul.f32 %v1468, %v1480
      %v1488 = vmul.f32 %v1473, %v1480
      %v1489 = vld [vmem:[%s6 + $0x1] sm:$0x1]
      %v1490 = vlaneseq
      %v1491 = vshrl.u32 %v1490, 7
      %v1492 = vsub.s32 0, %v1491
      %v1493 = vrot.slane %v1489, %v1492
      %v1494 = vadd.f32 %v1481, %v1493
      %v1495 = vadd.f32 %v1482, %v1493
      %v1496 = vadd.f32 %v1483, %v1493
      %v1497 = vadd.f32 %v1484, %v1493
      %v1498 = vadd.f32 %v1485, %v1493
      %v1499 = vadd.f32 %v1486, %v1493
      %v1500 = vadd.f32 %v1487, %v1493
      %v1501 = vadd.f32 %v1488, %v1493
      %v1502 = vmax.f32 %v1494, 0.0
      %v1503 = vmax.f32 %v1495, 0.0
      %v1504 = vmax.f32 %v1496, 0.0
      %v1505 = vmax.f32 %v1497, 0.0
      %v1506 = vmax.f32 %v1498, 0.0
      %v1507 = vmax.f32 %v1499, 0.0
      %v1508 = vmax.f32 %v1500, 0.0
      %v1509 = vmax.f32 %v1501, 0.0
      %v1510 = vld [vmem:[%s7] sm:$0xff]
      %v1511 = vld [vmem:[%s7 + $0x8] sm:$0xff]
      %v1512 = vld [vmem:[%s7 + $0x10] sm:$0xff]
      %v1513 = vld [vmem:[%s7 + $0x18] sm:$0xff]
      %v1514 = vld [vmem:[%s8] sm:$0x1]
      %v1516 = vlaneseq
      %v1517 = vshrl.u32 %v1516, 7
      %v1518 = vsub.s32 0, %v1517
      %v1519 = vrot.slane %v1514, %v1518
      %v1522 = vsel %vm459, %v1502, 0
      %v1525 = vsel %vm459, %v1503, 0
      %v1528 = vsel %vm459, %v1504, 0
      %v1531 = vsel %vm459, %v1505, 0
      %v1534 = vsel %vm459, %v1506, 0
      %v1537 = vsel %vm459, %v1507, 0
      %v1540 = vsel %vm459, %v1508, 0
      %v1543 = vsel %vm459, %v1509, 0
      %1545 = vmatprep.subr.mxu0 0.0
      %1546 = vmatpush1.msra.mxu0 %v1510
      %1547 = vmatprep.subr.mxu0 0.0
      %1548 = vmatpush1.msra.mxu0 %v1511
      %1549 = vmatprep.subr.mxu0 0.0
      %1550 = vmatpush1.msra.mxu0 %v1512
      %1551 = vmatprep.subr.mxu0 0.0
      %1552 = vmatpush1.msra.mxu0 %v1513
      %1553 = vmatprep.subr.mxu0 0.0
      %1554 = vmatpush1.msra.mxu0 0.0
      %1555 = vmatprep.subr.mxu0 0.0
      %1556 = vmatpush1.msra.mxu0 0.0
      %1557 = vmatprep.subr.mxu0 0.0
      %1558 = vmatpush1.msra.mxu0 0.0
      %1559 = vmatprep.subr.mxu0 0.0
      %1560 = vmatpush1.msra.mxu0 0.0
      %1561 = vmatprep.subr.mxu0 0.0
      %1562 = vmatpush1.msra.mxu0 0.0
      %1563 = vmatprep.subr.mxu0 0.0
      %1564 = vmatpush1.msra.mxu0 0.0
      %1565 = vmatprep.subr.mxu0 0.0
      %1566 = vmatpush1.msra.mxu0 0.0
      %1567 = vmatprep.subr.mxu0 0.0
      %1568 = vmatpush1.msra.mxu0 0.0
      %1569 = vmatprep.subr.mxu0 0.0
      %1570 = vmatpush1.msra.mxu0 0.0
      %1571 = vmatprep.subr.mxu0 0.0
      %1572 = vmatpush1.msra.mxu0 0.0
      %1573 = vmatprep.subr.mxu0 0.0
      %1574 = vmatpush1.msra.mxu0 0.0
      %1575 = vmatprep.subr.mxu0 0.0
      %1576 = vmatpush1.msra.mxu0 0.0
      %1577 = vmatprep.subr.mxu0 0.0
      %1578 = vmatpush1.msra.mxu0 0.0
      %1579 = vmatprep.subr.mxu0 0.0
      %1580 = vmatpush1.msra.mxu0 0.0
      %1581 = vmatprep.subr.mxu0 0.0
      %1582 = vmatpush1.msra.mxu0 0.0
      %1583 = vmatprep.subr.mxu0 0.0
      %1584 = vmatpush1.msra.mxu0 0.0
      %1585 = vmatprep.subr.mxu0 0.0
      %1586 = vmatpush1.msra.mxu0 0.0
      %1587 = vmatprep.subr.mxu0 0.0
      %1588 = vmatpush1.msra.mxu0 0.0
      %1589 = vmatprep.subr.mxu0 0.0
      %1590 = vmatpush1.msra.mxu0 0.0
      %1591 = vmatprep.subr.mxu0 0.0
      %1592 = vmatpush1.msra.mxu0 0.0
      %1593 = vmatprep.subr.mxu0 0.0
      %1594 = vmatpush1.msra.mxu0 0.0
      %1595 = vmatprep.subr.mxu0 0.0
      %1596 = vmatpush1.msra.mxu0 0.0
      %1597 = vmatprep.subr.mxu0 0.0
      %1598 = vmatpush1.msra.mxu0 0.0
      %1599 = vmatprep.subr.mxu0 0.0
      %1600 = vmatpush1.msra.mxu0 0.0
      %1601 = vmatprep.subr.mxu0 0.0
      %1602 = vmatpush1.msra.mxu0 0.0
      %1603 = vmatprep.subr.mxu0 0.0
      %1604 = vmatpush1.msra.mxu0 0.0
      %1605 = vmatprep.subr.mxu0 0.0
      %1606 = vmatpush1.msra.mxu0 0.0
      %1607 = vmatprep.subr.mxu0 0.0
      %1608 = vmatpush1.msra.mxu0 0.0
      %1609 = vmatprep.mubr.f32.mxu0 0.0
      %1610 = vmatmul.mubr.f32.gmra.mrb[0].mxu0 %v1522
      %v1611 = vpop.f32.mrb[0].mxu0
      %v1612 = vadd.f32 %v1519, %v1611
      %v1613 = vpop.f32.mrb[0].mxu0
      %1614 = vmatprep.mubr.f32.mxu0 0.0
      %1615 = vmatmul.mubr.f32.gmra.mrb[0].mxu0 %v1525
      %v1616 = vpop.f32.mrb[0].mxu0
      %v1617 = vadd.f32 %v1519, %v1616
      %v1618 = vpop.f32.mrb[0].mxu0
      %1619 = vmatprep.mubr.f32.mxu0 0.0
      %1620 = vmatmul.mubr.f32.gmra.mrb[0].mxu0 %v1528
      %v1621 = vpop.f32.mrb[0].mxu0
      %v1622 = vadd.f32 %v1519, %v1621
      %v1623 = vpop.f32.mrb[0].mxu0
      %1624 = vmatprep.mubr.f32.mxu0 0.0
      %1625 = vmatmul.mubr.f32.gmra.mrb[0].mxu0 %v1531
      %v1626 = vpop.f32.mrb[0].mxu0
      %v1627 = vadd.f32 %v1519, %v1626
      %v1628 = vpop.f32.mrb[0].mxu0
      %1629 = vmatprep.mubr.f32.mxu0 0.0
      %1630 = vmatmul.mubr.f32.gmra.mrb[0].mxu0 %v1534
      %v1631 = vpop.f32.mrb[0].mxu0
      %v1632 = vadd.f32 %v1519, %v1631
      %v1633 = vpop.f32.mrb[0].mxu0
      %1634 = vmatprep.mubr.f32.mxu0 0.0
      %1635 = vmatmul.mubr.f32.gmra.mrb[0].mxu0 %v1537
      %v1636 = vpop.f32.mrb[0].mxu0
      %v1637 = vadd.f32 %v1519, %v1636
      %v1638 = vpop.f32.mrb[0].mxu0
      %1639 = vmatprep.mubr.f32.mxu0 0.0
      %1640 = vmatmul.mubr.f32.gmra.mrb[0].mxu0 %v1540
      %v1641 = vpop.f32.mrb[0].mxu0
      %v1642 = vadd.f32 %v1519, %v1641
      %v1643 = vpop.f32.mrb[0].mxu0
      %1644 = vmatprep.mubr.f32.mxu0 0.0
      %1645 = vmatmul.mubr.f32.gmra.mrb[0].mxu0 %v1543
      %v1646 = vpop.f32.mrb[0].mxu0
      %v1647 = vadd.f32 %v1519, %v1646
      %v1648 = vpop.f32.mrb[0].mxu0
      %1649 = vdwg.mxu0
      %1650 = vst [vmem:[%s332] sm:$0xff] %v1612
      %1651 = vst [vmem:[%s332 + $0x8] sm:$0xff] %v1617
      %1652 = vst [vmem:[%s332 + $0x10] sm:$0xff] %v1622
      %1653 = vst [vmem:[%s332 + $0x18] sm:$0xff] %v1627
      %1654 = vst [vmem:[%s332 + $0x20] sm:$0xff] %v1632
      %1655 = vst [vmem:[%s332 + $0x28] sm:$0xff] %v1637
      %1656 = vst [vmem:[%s332 + $0x30] sm:$0xff] %v1642
      %1657 = vst [vmem:[%s332 + $0x38] sm:$0xff] %v1647
      %p1658 = scmp.lt.s32.totalorder %s20, 1
      %s1659 = scalar_select %p1658, %s20, 1
      %s1660 = smul.addr %s1659, 8
      %s1661 = smul.addr %s1660, 8
      %s1662 = scalar_lea.vmem %s9, %s1661
      // Predicated region
      $region57: #{dsh_forward.1} parent=55 // pred_check
        %p1663 = pneg %p232
      $region58: #{dsh_forward.1} parent=55 // pred_check_branch
        %1665 = sbr.rel (%p1663) target = $region60
      $region59: #{dsh_forward.1} parent=55 // pred_region
        _
      $region60: #{dsh_forward.1} parent=55 // pred_fallthru
        _
    $region56: #{dsh_forward.1} parent=5 // pred_fallthru
      _
    %p1666 = scmp.le.s32.totalorder 2, %s15
    // Predicated region
    $region61: #{dsh_forward.1} parent=5 // pred_check
      %p1667 = pneg %p1666
    $region62: #{dsh_forward.1} parent=5 // pred_check_branch
      %1669 = sbr.rel (%p1667) target = $region64
    $region63: #{dsh_forward.1} parent=5 // pred_region
      %s1670 = ssub.s32 %s15, 2
      // Predicated region
      $region65: #{dsh_forward.1} parent=63 // pred_check
        %p1671 = pneg %p238
      $region66: #{dsh_forward.1} parent=63 // pred_check_branch
        %1673 = sbr.rel (%p1671) target = $region68
      $region67: #{dsh_forward.1} parent=63 // pred_region
        %p1674 = scmp.lt.s32.totalorder %s21, 1
        %s1675 = scalar_select %p1674, %s21, 1
        %s1676 = smul.addr %s1675, 8
        %s1677 = smul.addr %s1676, 8
        %s1678 = scalar_lea.vmem %s9, %s1677
      $region68: #{dsh_forward.1} parent=63 // pred_fallthru
        _
    $region64: #{dsh_forward.1} parent=5 // pred_fallthru
      _
  $region6: #{dsh_forward.1} parent=0 // loop_footer
    %s19 = sadd.s32 1, %s15
  $region7: #{dsh_forward.1} parent=0 // loop_footer_branch
    %14 = sbr.rel target = $region3
  $region8: #{dsh_forward.1} parent=0 // loop_exit
    _

</llo_original>
